<compile_context>
chip_gen: v5e
topology: v5e:2x2
jax: 0.10.0
libtpu: 0.0.40
codegen_flags: <defaults>
</compile_context>

<pallas_src>
import math

import jax
import jax.numpy as jnp
from jax import lax
from jax.experimental import pallas as pl
from jax.experimental.pallas import tpu as pltpu


def siamese_attention_gru_kernel(sent_ref, emb_ref, wih_ref, bih_ref,
                                 whhf_ref, bhhf_ref, whhb_ref, bhhb_ref,
                                 wa_ref, ba_ref, wd1_ref, bd1_ref,
                                 wd2_ref, bd2_ref, out_ref):
    """One batch row per grid step: embed -> biGRU -> attention -> dense -> sigmoid."""
    _, T, _ = sent_ref.shape                     # sentence block (1, T, 1)
    V, E = emb_ref.shape
    H = whhf_ref.shape[0]
    f32 = jnp.float32

    # ---- fused embedding lookup: exact one-hot matmul on the MXU ----
    idx = sent_ref[0]                                                   # (T, 1) int32
    onehot = (lax.broadcasted_iota(jnp.int32, (T, V), 1) == idx).astype(f32)
    x = jnp.dot(onehot, emb_ref[...], preferred_element_type=f32)       # (T, E)

    # ---- hoisted input projection for BOTH directions, b_ih folded in ----
    gi = jnp.dot(x, wih_ref[...], preferred_element_type=f32) + bih_ref[...]   # (T, 6H)
    gi_f = gi[:, 0:3 * H]                                               # fwd [r|z|n]
    gi_b = gi[:, 3 * H:6 * H]                                           # bwd [r|z|n]

    whh_f = whhf_ref[...]
    whh_b = whhb_ref[...]
    bhh_f = bhhf_ref[...]                                               # (1, 3H), hoisted
    bhh_b = bhhb_ref[...]

    def gru_cell(g_in, h_prev, whh, bhh):
        gh = jnp.dot(h_prev, whh, preferred_element_type=f32) + bhh     # (1, 3H)
        r = jax.nn.sigmoid(g_in[:, 0:H] + gh[:, 0:H])
        z = jax.nn.sigmoid(g_in[:, H:2 * H] + gh[:, H:2 * H])
        n = jnp.tanh(g_in[:, 2 * H:3 * H] + r * gh[:, 2 * H:3 * H])
        return (1.0 - z) * n + z * h_prev

    # ---- fully-unrolled recurrences; fwd step t and bwd step T-1-t are
    #      independent serial chains, interleaved for MXU-latency overlap ----
    h_f = jnp.zeros((1, H), f32)
    h_b = jnp.zeros((1, H), f32)
    hf = [None] * T
    hb = [None] * T
    for s in range(T):
        tf, tb = s, T - 1 - s
        h_f = gru_cell(gi_f[tf:tf + 1, :], h_f, whh_f, bhh_f)
        h_b = gru_cell(gi_b[tb:tb + 1, :], h_b, whh_b, bhh_b)
        hf[tf] = h_f
        hb[tb] = h_b

    # ---- rnn_cat for this batch row: (T, 2H) ----
    hf_all = jnp.concatenate(hf, axis=0)                                # (T, H)
    hb_all = jnp.concatenate(hb, axis=0)                                # (T, H)
    cat = jnp.concatenate([hf_all, hb_all], axis=1)                     # (T, 2H)

    # ---- Attention: eij = cat @ Wa + b, softmax over the SEQ dim (torch dim=1),
    #      then sum_i (a @ cat)[i]  ==  (column-sums of a) @ cat ----
    eij = jnp.dot(cat, wa_ref[...], preferred_element_type=f32) + ba_ref[...]   # (T, T)
    m = jnp.max(eij, axis=0, keepdims=True)
    p = jnp.exp(eij - m)
    a = p / jnp.sum(p, axis=0, keepdims=True)
    att = jnp.dot(jnp.sum(a, axis=0, keepdims=True), cat,
                  preferred_element_type=f32)                           # (1, 2H)

    # ---- dense head: Linear -> ReLU -> Dropout(identity, eval) -> Linear -> Sigmoid
    # TODO(synk): training-mode Dropout(p=0.2) (RNG mask) not implemented; inference identity.
    dense_in = jnp.concatenate([att, hf[T - 1], hb[T - 1]], axis=1)     # (1, 4H)
    d1 = jnp.maximum(
        jnp.dot(dense_in, wd1_ref[...], preferred_element_type=f32) + bd1_ref[...], 0.0)
    logits = jnp.dot(d1, wd2_ref[...], preferred_element_type=f32) + bd2_ref[...]
    out_ref[0] = jax.nn.sigmoid(logits)                                 # (1, O)


def prepare_params(p):
    """One-time weight re-layout (transposes/concats) OUTSIDE the per-call path."""
    H = p["w_hh_f"].shape[1]
    T = p["w_att"].shape[1]
    D = p["w_d1"].shape[0]
    O = p["w_d2"].shape[0]
    return dict(
        emb=p["embedding"].astype(jnp.float32),
        wih=jnp.concatenate([p["w_ih_f"].T, p["w_ih_b"].T], axis=1),    # (E, 6H)
        bih=jnp.concatenate([p["b_ih_f"], p["b_ih_b"]]).reshape(1, 6 * H),
        whh_f=p["w_hh_f"].T, bhh_f=p["b_hh_f"].reshape(1, 3 * H),
        whh_b=p["w_hh_b"].T, bhh_b=p["b_hh_b"].reshape(1, 3 * H),
        w_att=p["w_att"], b_att=p["b_att"].reshape(1, T),
        w_d1=p["w_d1"].T, b_d1=p["b_d1"].reshape(1, D),
        w_d2=p["w_d2"].T, b_d2=p["b_d2"].reshape(1, O),
    )


def siamese_attention_rnn(sentence, prepped):
    """sentence: (T, B) int32 token ids (time-major, like the PyTorch module)."""
    T, B = sentence.shape
    O = prepped["w_d2"].shape[1]

    # (B, T, 1) so the last two block dims equal the full array dims.
    sent = sentence.astype(jnp.int32).T.reshape(B, T, 1)

    weights = (prepped["emb"], prepped["wih"], prepped["bih"],
               prepped["whh_f"], prepped["bhh_f"],
               prepped["whh_b"], prepped["bhh_b"],
               prepped["w_att"], prepped["b_att"],
               prepped["w_d1"], prepped["b_d1"],
               prepped["w_d2"], prepped["b_d2"])

    def const_spec(x):
        nd = x.ndim
        return pl.BlockSpec(x.shape, lambda b: (0,) * nd)

    out = pl.pallas_call(
        siamese_attention_gru_kernel,
        out_shape=jax.ShapeDtypeStruct((B, 1, O), jnp.float32),
        grid=(B,),
        in_specs=[pl.BlockSpec((1, T, 1), lambda b: (b, 0, 0))]
                 + [const_spec(w) for w in weights],
        out_specs=pl.BlockSpec((1, 1, O), lambda b: (b, 0, 0)),
        compiler_params=pltpu.CompilerParams(dimension_semantics=("parallel",)),
    )(sent, *weights)
    return out.reshape(B, O)


def init_params(key, vocab, embed_dim, hidden, max_len, dense_size, output_size):
    """Deterministic synthetic init; shapes match nn.Embedding / nn.GRU / Attention / nn.Linear."""
    assert embed_dim == hidden, "module requires embedding_dim == hidden_layer_size"
    ks = jax.random.split(key, 15)
    s = 1.0 / math.sqrt(hidden)
    sd = 1.0 / math.sqrt(4 * hidden)
    so = 1.0 / math.sqrt(dense_size)

    def u(k, shape, bound):
        return jax.random.uniform(k, shape, jnp.float32, -bound, bound)

    return dict(
        embedding=jax.random.normal(ks[0], (vocab, embed_dim), jnp.float32),
        w_ih_f=u(ks[1], (3 * hidden, embed_dim), s),
        w_hh_f=u(ks[2], (3 * hidden, hidden), s),
        b_ih_f=u(ks[3], (3 * hidden,), s),
        b_hh_f=u(ks[4], (3 * hidden,), s),
        w_ih_b=u(ks[5], (3 * hidden, embed_dim), s),
        w_hh_b=u(ks[6], (3 * hidden, hidden), s),
        b_ih_b=u(ks[7], (3 * hidden,), s),
        b_hh_b=u(ks[8], (3 * hidden,), s),
        # Attention(feature_dim=2*E, step_dim=max_len); bias nonzero here to exercise the path.
        w_att=u(ks[9], (2 * embed_dim, max_len), math.sqrt(6.0 / max_len)),
        b_att=u(ks[10], (max_len,), 0.1),
        w_d1=u(ks[11], (dense_size, 4 * hidden), sd),
        b_d1=u(ks[12], (dense_size,), sd),
        w_d2=u(ks[13], (output_size, dense_size), so),
        b_d2=u(ks[14], (output_size,), so),
    )


def reference(sentence, params):
    """Pure-JAX reference reproducing the PyTorch forward exactly (eval mode)."""
    emb = params["embedding"][sentence].astype(jnp.float32)             # (T, B, E)
    T, B, _ = emb.shape
    H = params["w_hh_f"].shape[1]

    def gru_direction(xs, w_ih, w_hh, b_ih, b_hh, reverse):
        def step(h, x_t):
            gi = x_t @ w_ih.T + b_ih
            gh = h @ w_hh.T + b_hh
            r = jax.nn.sigmoid(gi[:, :H] + gh[:, :H])
            z = jax.nn.sigmoid(gi[:, H:2 * H] + gh[:, H:2 * H])
            n = jnp.tanh(gi[:, 2 * H:] + r * gh[:, 2 * H:])
            h_new = (1.0 - z) * n + z * h
            return h_new, h_new
        _, ys = lax.scan(step, jnp.zeros((B, H), jnp.float32), xs, reverse=reverse)
        return ys                                                        # (T, B, H)

    hf = gru_direction(emb, params["w_ih_f"], params["w_hh_f"],
                       params["b_ih_f"], params["b_hh_f"], reverse=False)
    hb = gru_direction(emb, params["w_ih_b"], params["w_hh_b"],
                       params["b_ih_b"], params["b_hh_b"], reverse=True)

    rnn_forward = jnp.transpose(hf, (1, 0, 2))                           # (B, T, H)
    rnn_backward = jnp.transpose(hb, (1, 0, 2))
    rnn_cat = jnp.concatenate([rnn_forward, rnn_backward], axis=-1)      # (B, T, 2H)

    eij = jnp.einsum("btd,dk->btk", rnn_cat, params["w_att"]) + params["b_att"]
    a = jax.nn.softmax(eij, axis=1)                                      # softmax over seq dim
    attention = jnp.einsum("bij,bjk->bik", a, rnn_cat).sum(axis=1)       # (B, 2H)

    dense_in = jnp.concatenate(
        [attention, rnn_forward[:, -1, :], rnn_backward[:, -1, :]], axis=-1)
    d1 = jax.nn.relu(dense_in @ params["w_d1"].T + params["b_d1"])
    return jax.nn.sigmoid(d1 @ params["w_d2"].T + params["b_d2"])


if __name__ == "__main__":
    vocab, embed_dim, max_len, batch = 50, 32, 8, 2
    hidden = embed_dim                   # module constraint (attention bmm shapes)
    dense_size, output_size = 32, 4

    key = jax.random.PRNGKey(0)
    kp, kd = jax.random.split(key)
    params = init_params(kp, vocab, embed_dim, hidden, max_len, dense_size, output_size)
    sentence = jax.random.randint(kd, (max_len, batch), 0, vocab, dtype=jnp.int32)

    prepped = prepare_params(params)     # one-time layout prep, outside the call path

    out = siamese_attention_rnn(sentence, prepped)
    out = jax.block_until_ready(out)

    ref = reference(sentence, params)
    assert out.shape == (batch, output_size), out.shape
    err = float(jnp.max(jnp.abs(out - ref)))
    assert err < 2e-3, f"max abs err {err}"
    print("KERNEL_OK")
</pallas_src>

<mosaic_0001>
module attributes {stable_mosaic.version = 11 : i64} {
  func.func @siamese_attention_gru_kernel(%arg0: i32, %arg1: memref<1x8x1xi32, #tpu.memory_space<vmem>>, %arg2: memref<50x32xf32, #tpu.memory_space<vmem>>, %arg3: memref<32x192xf32, #tpu.memory_space<vmem>>, %arg4: memref<1x192xf32, #tpu.memory_space<vmem>>, %arg5: memref<32x96xf32, #tpu.memory_space<vmem>>, %arg6: memref<1x96xf32, #tpu.memory_space<vmem>>, %arg7: memref<32x96xf32, #tpu.memory_space<vmem>>, %arg8: memref<1x96xf32, #tpu.memory_space<vmem>>, %arg9: memref<64x8xf32, #tpu.memory_space<vmem>>, %arg10: memref<1x8xf32, #tpu.memory_space<vmem>>, %arg11: memref<128x32xf32, #tpu.memory_space<vmem>>, %arg12: memref<1x32xf32, #tpu.memory_space<vmem>>, %arg13: memref<32x4xf32, #tpu.memory_space<vmem>>, %arg14: memref<1x4xf32, #tpu.memory_space<vmem>>, %arg15: memref<1x1x4xf32, #tpu.memory_space<vmem>>) attributes {dimension_semantics = [#tpu.dimension_semantics<parallel>], iteration_bounds = array<i64: 2>, scalar_prefetch = 0 : i64, scratch_operands = 0 : i64, tpu.core_type = #tpu.core_type<tc>, window_params = [{transform_indices = @transform_0, window_bounds = array<i64: 1, 8, 1>}, {pipeline_mode = #tpu.pipeline_mode<synchronous>, transform_indices = @transform_1, window_bounds = array<i64: 50, 32>}, {pipeline_mode = #tpu.pipeline_mode<synchronous>, transform_indices = @transform_2, window_bounds = array<i64: 32, 192>}, {pipeline_mode = #tpu.pipeline_mode<synchronous>, transform_indices = @transform_3, window_bounds = array<i64: 1, 192>}, {pipeline_mode = #tpu.pipeline_mode<synchronous>, transform_indices = @transform_4, window_bounds = array<i64: 32, 96>}, {pipeline_mode = #tpu.pipeline_mode<synchronous>, transform_indices = @transform_5, window_bounds = array<i64: 1, 96>}, {pipeline_mode = #tpu.pipeline_mode<synchronous>, transform_indices = @transform_6, window_bounds = array<i64: 32, 96>}, {pipeline_mode = #tpu.pipeline_mode<synchronous>, transform_indices = @transform_7, window_bounds = array<i64: 1, 96>}, {pipeline_mode = #tpu.pipeline_mode<synchronous>, transform_indices = @transform_8, window_bounds = array<i64: 64, 8>}, {pipeline_mode = #tpu.pipeline_mode<synchronous>, transform_indices = @transform_9, window_bounds = array<i64: 1, 8>}, {pipeline_mode = #tpu.pipeline_mode<synchronous>, transform_indices = @transform_10, window_bounds = array<i64: 128, 32>}, {pipeline_mode = #tpu.pipeline_mode<synchronous>, transform_indices = @transform_11, window_bounds = array<i64: 1, 32>}, {pipeline_mode = #tpu.pipeline_mode<synchronous>, transform_indices = @transform_12, window_bounds = array<i64: 32, 4>}, {pipeline_mode = #tpu.pipeline_mode<synchronous>, transform_indices = @transform_13, window_bounds = array<i64: 1, 4>}, {transform_indices = @transform_14, window_bounds = array<i64: 1, 1, 4>}]} {
    %c0 = arith.constant 0 : index
    %c0_0 = arith.constant 0 : index
    %c0_1 = arith.constant 0 : index
    %0 = vector.load %arg1[%c0, %c0_0, %c0_1] : memref<1x8x1xi32, #tpu.memory_space<vmem>>, vector<1x8x1xi32>
    %1 = vector.shape_cast %0 : vector<1x8x1xi32> to vector<8x1xi32>
    %2 = tpu.iota {dimensions = array<i32: 1>} : vector<8x50xi32>
    %3 = vector.broadcast %1 : vector<8x1xi32> to vector<8x50xi32>
    %4 = arith.cmpi eq, %2, %3 : vector<8x50xi32>
    %5 = arith.extui %4 : vector<8x50xi1> to vector<8x50xi32>
    %6 = arith.sitofp %5 : vector<8x50xi32> to vector<8x50xf32>
    %c0_2 = arith.constant 0 : index
    %c0_3 = arith.constant 0 : index
    %7 = vector.load %arg2[%c0_2, %c0_3] : memref<50x32xf32, #tpu.memory_space<vmem>>, vector<50x32xf32>
    %cst = arith.constant dense<0.000000e+00> : vector<8x32xf32>
    %8 = tpu.matmul %6, %7, %cst {dimension_numbers = #tpu.dot_dimension_numbers<[1], [0], [0], [1], [0, 0, 1, 1], [], []>} : vector<8x50xf32>, vector<50x32xf32>, vector<8x32xf32> -> vector<8x32xf32>
    %c0_4 = arith.constant 0 : index
    %c0_5 = arith.constant 0 : index
    %9 = vector.load %arg3[%c0_4, %c0_5] : memref<32x192xf32, #tpu.memory_space<vmem>>, vector<32x192xf32>
    %cst_6 = arith.constant dense<0.000000e+00> : vector<8x192xf32>
    %10 = tpu.matmul %8, %9, %cst_6 {dimension_numbers = #tpu.dot_dimension_numbers<[1], [0], [0], [1], [0, 0, 1, 1], [], []>} : vector<8x32xf32>, vector<32x192xf32>, vector<8x192xf32> -> vector<8x192xf32>
    %c0_7 = arith.constant 0 : index
    %c0_8 = arith.constant 0 : index
    %11 = vector.load %arg4[%c0_7, %c0_8] : memref<1x192xf32, #tpu.memory_space<vmem>>, vector<1x192xf32>
    %12 = vector.broadcast %11 : vector<1x192xf32> to vector<8x192xf32>
    %13 = arith.addf %10, %12 : vector<8x192xf32>
    %14 = vector.extract_strided_slice %13 {offsets = [0, 0], sizes = [8, 96], strides = [1, 1]} : vector<8x192xf32> to vector<8x96xf32>
    %15 = vector.extract_strided_slice %13 {offsets = [0, 96], sizes = [8, 96], strides = [1, 1]} : vector<8x192xf32> to vector<8x96xf32>
    %c0_9 = arith.constant 0 : index
    %c0_10 = arith.constant 0 : index
    %16 = vector.load %arg5[%c0_9, %c0_10] : memref<32x96xf32, #tpu.memory_space<vmem>>, vector<32x96xf32>
    %c0_11 = arith.constant 0 : index
    %c0_12 = arith.constant 0 : index
    %17 = vector.load %arg7[%c0_11, %c0_12] : memref<32x96xf32, #tpu.memory_space<vmem>>, vector<32x96xf32>
    %c0_13 = arith.constant 0 : index
    %c0_14 = arith.constant 0 : index
    %18 = vector.load %arg6[%c0_13, %c0_14] : memref<1x96xf32, #tpu.memory_space<vmem>>, vector<1x96xf32>
    %c0_15 = arith.constant 0 : index
    %c0_16 = arith.constant 0 : index
    %19 = vector.load %arg8[%c0_15, %c0_16] : memref<1x96xf32, #tpu.memory_space<vmem>>, vector<1x96xf32>
    %cst_17 = arith.constant 0.000000e+00 : f32
    %20 = vector.broadcast %cst_17 : f32 to vector<1x32xf32>
    %cst_18 = arith.constant 0.000000e+00 : f32
    %21 = vector.broadcast %cst_18 : f32 to vector<1x32xf32>
    %22 = vector.extract_strided_slice %14 {offsets = [0, 0], sizes = [1, 96], strides = [1, 1]} : vector<8x96xf32> to vector<1x96xf32>
    %cst_19 = arith.constant dense<0.000000e+00> : vector<1x96xf32>
    %23 = tpu.matmul %20, %16, %cst_19 {dimension_numbers = #tpu.dot_dimension_numbers<[1], [0], [0], [1], [0, 0, 1, 1], [], []>} : vector<1x32xf32>, vector<32x96xf32>, vector<1x96xf32> -> vector<1x96xf32>
    %24 = arith.addf %23, %18 : vector<1x96xf32>
    %25 = vector.extract_strided_slice %22 {offsets = [0, 0], sizes = [1, 32], strides = [1, 1]} : vector<1x96xf32> to vector<1x32xf32>
    %26 = vector.extract_strided_slice %24 {offsets = [0, 0], sizes = [1, 32], strides = [1, 1]} : vector<1x96xf32> to vector<1x32xf32>
    %27 = arith.addf %25, %26 : vector<1x32xf32>
    %28 = arith.negf %27 : vector<1x32xf32>
    %29 = math.exp %28 : vector<1x32xf32>
    %cst_20 = arith.constant 1.000000e+00 : f32
    %30 = vector.broadcast %cst_20 : f32 to vector<1x32xf32>
    %31 = arith.addf %30, %29 : vector<1x32xf32>
    %32 = arith.divf %30, %31 : vector<1x32xf32>
    %33 = vector.extract_strided_slice %22 {offsets = [0, 32], sizes = [1, 32], strides = [1, 1]} : vector<1x96xf32> to vector<1x32xf32>
    %34 = vector.extract_strided_slice %24 {offsets = [0, 32], sizes = [1, 32], strides = [1, 1]} : vector<1x96xf32> to vector<1x32xf32>
    %35 = arith.addf %33, %34 : vector<1x32xf32>
    %36 = arith.negf %35 : vector<1x32xf32>
    %37 = math.exp %36 : vector<1x32xf32>
    %cst_21 = arith.constant 1.000000e+00 : f32
    %38 = vector.broadcast %cst_21 : f32 to vector<1x32xf32>
    %39 = arith.addf %38, %37 : vector<1x32xf32>
    %40 = arith.divf %38, %39 : vector<1x32xf32>
    %41 = vector.extract_strided_slice %22 {offsets = [0, 64], sizes = [1, 32], strides = [1, 1]} : vector<1x96xf32> to vector<1x32xf32>
    %42 = vector.extract_strided_slice %24 {offsets = [0, 64], sizes = [1, 32], strides = [1, 1]} : vector<1x96xf32> to vector<1x32xf32>
    %43 = arith.mulf %32, %42 : vector<1x32xf32>
    %44 = arith.addf %41, %43 : vector<1x32xf32>
    %45 = math.tanh %44 : vector<1x32xf32>
    %cst_22 = arith.constant 1.000000e+00 : f32
    %46 = vector.broadcast %cst_22 : f32 to vector<1x32xf32>
    %47 = arith.subf %46, %40 : vector<1x32xf32>
    %48 = arith.mulf %47, %45 : vector<1x32xf32>
    %49 = arith.mulf %40, %20 : vector<1x32xf32>
    %50 = arith.addf %48, %49 : vector<1x32xf32>
    %51 = vector.extract_strided_slice %15 {offsets = [7, 0], sizes = [1, 96], strides = [1, 1]} : vector<8x96xf32> to vector<1x96xf32>
    %cst_23 = arith.constant dense<0.000000e+00> : vector<1x96xf32>
    %52 = tpu.matmul %21, %17, %cst_23 {dimension_numbers = #tpu.dot_dimension_numbers<[1], [0], [0], [1], [0, 0, 1, 1], [], []>} : vector<1x32xf32>, vector<32x96xf32>, vector<1x96xf32> -> vector<1x96xf32>
    %53 = arith.addf %52, %19 : vector<1x96xf32>
    %54 = vector.extract_strided_slice %51 {offsets = [0, 0], sizes = [1, 32], strides = [1, 1]} : vector<1x96xf32> to vector<1x32xf32>
    %55 = vector.extract_strided_slice %53 {offsets = [0, 0], sizes = [1, 32], strides = [1, 1]} : vector<1x96xf32> to vector<1x32xf32>
    %56 = arith.addf %54, %55 : vector<1x32xf32>
    %57 = arith.negf %56 : vector<1x32xf32>
    %58 = math.exp %57 : vector<1x32xf32>
    %cst_24 = arith.constant 1.000000e+00 : f32
    %59 = vector.broadcast %cst_24 : f32 to vector<1x32xf32>
    %60 = arith.addf %59, %58 : vector<1x32xf32>
    %61 = arith.divf %59, %60 : vector<1x32xf32>
    %62 = vector.extract_strided_slice %51 {offsets = [0, 32], sizes = [1, 32], strides = [1, 1]} : vector<1x96xf32> to vector<1x32xf32>
    %63 = vector.extract_strided_slice %53 {offsets = [0, 32], sizes = [1, 32], strides = [1, 1]} : vector<1x96xf32> to vector<1x32xf32>
    %64 = arith.addf %62, %63 : vector<1x32xf32>
    %65 = arith.negf %64 : vector<1x32xf32>
    %66 = math.exp %65 : vector<1x32xf32>
    %cst_25 = arith.constant 1.000000e+00 : f32
    %67 = vector.broadcast %cst_25 : f32 to vector<1x32xf32>
    %68 = arith.addf %67, %66 : vector<1x32xf32>
    %69 = arith.divf %67, %68 : vector<1x32xf32>
    %70 = vector.extract_strided_slice %51 {offsets = [0, 64], sizes = [1, 32], strides = [1, 1]} : vector<1x96xf32> to vector<1x32xf32>
    %71 = vector.extract_strided_slice %53 {offsets = [0, 64], sizes = [1, 32], strides = [1, 1]} : vector<1x96xf32> to vector<1x32xf32>
    %72 = arith.mulf %61, %71 : vector<1x32xf32>
    %73 = arith.addf %70, %72 : vector<1x32xf32>
    %74 = math.tanh %73 : vector<1x32xf32>
    %cst_26 = arith.constant 1.000000e+00 : f32
    %75 = vector.broadcast %cst_26 : f32 to vector<1x32xf32>
    %76 = arith.subf %75, %69 : vector<1x32xf32>
    %77 = arith.mulf %76, %74 : vector<1x32xf32>
    %78 = arith.mulf %69, %21 : vector<1x32xf32>
    %79 = arith.addf %77, %78 : vector<1x32xf32>
    %80 = vector.extract_strided_slice %14 {offsets = [1, 0], sizes = [1, 96], strides = [1, 1]} : vector<8x96xf32> to vector<1x96xf32>
    %cst_27 = arith.constant dense<0.000000e+00> : vector<1x96xf32>
    %81 = tpu.matmul %50, %16, %cst_27 {dimension_numbers = #tpu.dot_dimension_numbers<[1], [0], [0], [1], [0, 0, 1, 1], [], []>} : vector<1x32xf32>, vector<32x96xf32>, vector<1x96xf32> -> vector<1x96xf32>
    %82 = arith.addf %81, %18 : vector<1x96xf32>
    %83 = vector.extract_strided_slice %80 {offsets = [0, 0], sizes = [1, 32], strides = [1, 1]} : vector<1x96xf32> to vector<1x32xf32>
    %84 = vector.extract_strided_slice %82 {offsets = [0, 0], sizes = [1, 32], strides = [1, 1]} : vector<1x96xf32> to vector<1x32xf32>
    %85 = arith.addf %83, %84 : vector<1x32xf32>
    %86 = arith.negf %85 : vector<1x32xf32>
    %87 = math.exp %86 : vector<1x32xf32>
    %cst_28 = arith.constant 1.000000e+00 : f32
    %88 = vector.broadcast %cst_28 : f32 to vector<1x32xf32>
    %89 = arith.addf %88, %87 : vector<1x32xf32>
    %90 = arith.divf %88, %89 : vector<1x32xf32>
    %91 = vector.extract_strided_slice %80 {offsets = [0, 32], sizes = [1, 32], strides = [1, 1]} : vector<1x96xf32> to vector<1x32xf32>
    %92 = vector.extract_strided_slice %82 {offsets = [0, 32], sizes = [1, 32], strides = [1, 1]} : vector<1x96xf32> to vector<1x32xf32>
    %93 = arith.addf %91, %92 : vector<1x32xf32>
    %94 = arith.negf %93 : vector<1x32xf32>
    %95 = math.exp %94 : vector<1x32xf32>
    %cst_29 = arith.constant 1.000000e+00 : f32
    %96 = vector.broadcast %cst_29 : f32 to vector<1x32xf32>
    %97 = arith.addf %96, %95 : vector<1x32xf32>
    %98 = arith.divf %96, %97 : vector<1x32xf32>
    %99 = vector.extract_strided_slice %80 {offsets = [0, 64], sizes = [1, 32], strides = [1, 1]} : vector<1x96xf32> to vector<1x32xf32>
    %100 = vector.extract_strided_slice %82 {offsets = [0, 64], sizes = [1, 32], strides = [1, 1]} : vector<1x96xf32> to vector<1x32xf32>
    %101 = arith.mulf %90, %100 : vector<1x32xf32>
    %102 = arith.addf %99, %101 : vector<1x32xf32>
    %103 = math.tanh %102 : vector<1x32xf32>
    %cst_30 = arith.constant 1.000000e+00 : f32
    %104 = vector.broadcast %cst_30 : f32 to vector<1x32xf32>
    %105 = arith.subf %104, %98 : vector<1x32xf32>
    %106 = arith.mulf %105, %103 : vector<1x32xf32>
    %107 = arith.mulf %98, %50 : vector<1x32xf32>
    %108 = arith.addf %106, %107 : vector<1x32xf32>
    %109 = vector.extract_strided_slice %15 {offsets = [6, 0], sizes = [1, 96], strides = [1, 1]} : vector<8x96xf32> to vector<1x96xf32>
    %cst_31 = arith.constant dense<0.000000e+00> : vector<1x96xf32>
    %110 = tpu.matmul %79, %17, %cst_31 {dimension_numbers = #tpu.dot_dimension_numbers<[1], [0], [0], [1], [0, 0, 1, 1], [], []>} : vector<1x32xf32>, vector<32x96xf32>, vector<1x96xf32> -> vector<1x96xf32>
    %111 = arith.addf %110, %19 : vector<1x96xf32>
    %112 = vector.extract_strided_slice %109 {offsets = [0, 0], sizes = [1, 32], strides = [1, 1]} : vector<1x96xf32> to vector<1x32xf32>
    %113 = vector.extract_strided_slice %111 {offsets = [0, 0], sizes = [1, 32], strides = [1, 1]} : vector<1x96xf32> to vector<1x32xf32>
    %114 = arith.addf %112, %113 : vector<1x32xf32>
    %115 = arith.negf %114 : vector<1x32xf32>
    %116 = math.exp %115 : vector<1x32xf32>
    %cst_32 = arith.constant 1.000000e+00 : f32
    %117 = vector.broadcast %cst_32 : f32 to vector<1x32xf32>
    %118 = arith.addf %117, %116 : vector<1x32xf32>
    %119 = arith.divf %117, %118 : vector<1x32xf32>
    %120 = vector.extract_strided_slice %109 {offsets = [0, 32], sizes = [1, 32], strides = [1, 1]} : vector<1x96xf32> to vector<1x32xf32>
    %121 = vector.extract_strided_slice %111 {offsets = [0, 32], sizes = [1, 32], strides = [1, 1]} : vector<1x96xf32> to vector<1x32xf32>
    %122 = arith.addf %120, %121 : vector<1x32xf32>
    %123 = arith.negf %122 : vector<1x32xf32>
    %124 = math.exp %123 : vector<1x32xf32>
    %cst_33 = arith.constant 1.000000e+00 : f32
    %125 = vector.broadcast %cst_33 : f32 to vector<1x32xf32>
    %126 = arith.addf %125, %124 : vector<1x32xf32>
    %127 = arith.divf %125, %126 : vector<1x32xf32>
    %128 = vector.extract_strided_slice %109 {offsets = [0, 64], sizes = [1, 32], strides = [1, 1]} : vector<1x96xf32> to vector<1x32xf32>
    %129 = vector.extract_strided_slice %111 {offsets = [0, 64], sizes = [1, 32], strides = [1, 1]} : vector<1x96xf32> to vector<1x32xf32>
    %130 = arith.mulf %119, %129 : vector<1x32xf32>
    %131 = arith.addf %128, %130 : vector<1x32xf32>
    %132 = math.tanh %131 : vector<1x32xf32>
    %cst_34 = arith.constant 1.000000e+00 : f32
    %133 = vector.broadcast %cst_34 : f32 to vector<1x32xf32>
    %134 = arith.subf %133, %127 : vector<1x32xf32>
    %135 = arith.mulf %134, %132 : vector<1x32xf32>
    %136 = arith.mulf %127, %79 : vector<1x32xf32>
    %137 = arith.addf %135, %136 : vector<1x32xf32>
    %138 = vector.extract_strided_slice %14 {offsets = [2, 0], sizes = [1, 96], strides = [1, 1]} : vector<8x96xf32> to vector<1x96xf32>
    %cst_35 = arith.constant dense<0.000000e+00> : vector<1x96xf32>
    %139 = tpu.matmul %108, %16, %cst_35 {dimension_numbers = #tpu.dot_dimension_numbers<[1], [0], [0], [1], [0, 0, 1, 1], [], []>} : vector<1x32xf32>, vector<32x96xf32>, vector<1x96xf32> -> vector<1x96xf32>
    %140 = arith.addf %139, %18 : vector<1x96xf32>
    %141 = vector.extract_strided_slice %138 {offsets = [0, 0], sizes = [1, 32], strides = [1, 1]} : vector<1x96xf32> to vector<1x32xf32>
    %142 = vector.extract_strided_slice %140 {offsets = [0, 0], sizes = [1, 32], strides = [1, 1]} : vector<1x96xf32> to vector<1x32xf32>
    %143 = arith.addf %141, %142 : vector<1x32xf32>
    %144 = arith.negf %143 : vector<1x32xf32>
    %145 = math.exp %144 : vector<1x32xf32>
    %cst_36 = arith.constant 1.000000e+00 : f32
    %146 = vector.broadcast %cst_36 : f32 to vector<1x32xf32>
    %147 = arith.addf %146, %145 : vector<1x32xf32>
    %148 = arith.divf %146, %147 : vector<1x32xf32>
    %149 = vector.extract_strided_slice %138 {offsets = [0, 32], sizes = [1, 32], strides = [1, 1]} : vector<1x96xf32> to vector<1x32xf32>
    %150 = vector.extract_strided_slice %140 {offsets = [0, 32], sizes = [1, 32], strides = [1, 1]} : vector<1x96xf32> to vector<1x32xf32>
    %151 = arith.addf %149, %150 : vector<1x32xf32>
    %152 = arith.negf %151 : vector<1x32xf32>
    %153 = math.exp %152 : vector<1x32xf32>
    %cst_37 = arith.constant 1.000000e+00 : f32
    %154 = vector.broadcast %cst_37 : f32 to vector<1x32xf32>
    %155 = arith.addf %154, %153 : vector<1x32xf32>
    %156 = arith.divf %154, %155 : vector<1x32xf32>
    %157 = vector.extract_strided_slice %138 {offsets = [0, 64], sizes = [1, 32], strides = [1, 1]} : vector<1x96xf32> to vector<1x32xf32>
    %158 = vector.extract_strided_slice %140 {offsets = [0, 64], sizes = [1, 32], strides = [1, 1]} : vector<1x96xf32> to vector<1x32xf32>
    %159 = arith.mulf %148, %158 : vector<1x32xf32>
    %160 = arith.addf %157, %159 : vector<1x32xf32>
    %161 = math.tanh %160 : vector<1x32xf32>
    %cst_38 = arith.constant 1.000000e+00 : f32
    %162 = vector.broadcast %cst_38 : f32 to vector<1x32xf32>
    %163 = arith.subf %162, %156 : vector<1x32xf32>
    %164 = arith.mulf %163, %161 : vector<1x32xf32>
    %165 = arith.mulf %156, %108 : vector<1x32xf32>
    %166 = arith.addf %164, %165 : vector<1x32xf32>
    %167 = vector.extract_strided_slice %15 {offsets = [5, 0], sizes = [1, 96], strides = [1, 1]} : vector<8x96xf32> to vector<1x96xf32>
    %cst_39 = arith.constant dense<0.000000e+00> : vector<1x96xf32>
    %168 = tpu.matmul %137, %17, %cst_39 {dimension_numbers = #tpu.dot_dimension_numbers<[1], [0], [0], [1], [0, 0, 1, 1], [], []>} : vector<1x32xf32>, vector<32x96xf32>, vector<1x96xf32> -> vector<1x96xf32>
    %169 = arith.addf %168, %19 : vector<1x96xf32>
    %170 = vector.extract_strided_slice %167 {offsets = [0, 0], sizes = [1, 32], strides = [1, 1]} : vector<1x96xf32> to vector<1x32xf32>
    %171 = vector.extract_strided_slice %169 {offsets = [0, 0], sizes = [1, 32], strides = [1, 1]} : vector<1x96xf32> to vector<1x32xf32>
    %172 = arith.addf %170, %171 : vector<1x32xf32>
    %173 = arith.negf %172 : vector<1x32xf32>
    %174 = math.exp %173 : vector<1x32xf32>
    %cst_40 = arith.constant 1.000000e+00 : f32
    %175 = vector.broadcast %cst_40 : f32 to vector<1x32xf32>
    %176 = arith.addf %175, %174 : vector<1x32xf32>
    %177 = arith.divf %175, %176 : vector<1x32xf32>
    %178 = vector.extract_strided_slice %167 {offsets = [0, 32], sizes = [1, 32], strides = [1, 1]} : vector<1x96xf32> to vector<1x32xf32>
    %179 = vector.extract_strided_slice %169 {offsets = [0, 32], sizes = [1, 32], strides = [1, 1]} : vector<1x96xf32> to vector<1x32xf32>
    %180 = arith.addf %178, %179 : vector<1x32xf32>
    %181 = arith.negf %180 : vector<1x32xf32>
    %182 = math.exp %181 : vector<1x32xf32>
    %cst_41 = arith.constant 1.000000e+00 : f32
    %183 = vector.broadcast %cst_41 : f32 to vector<1x32xf32>
    %184 = arith.addf %183, %182 : vector<1x32xf32>
    %185 = arith.divf %183, %184 : vector<1x32xf32>
    %186 = vector.extract_strided_slice %167 {offsets = [0, 64], sizes = [1, 32], strides = [1, 1]} : vector<1x96xf32> to vector<1x32xf32>
    %187 = vector.extract_strided_slice %169 {offsets = [0, 64], sizes = [1, 32], strides = [1, 1]} : vector<1x96xf32> to vector<1x32xf32>
    %188 = arith.mulf %177, %187 : vector<1x32xf32>
    %189 = arith.addf %186, %188 : vector<1x32xf32>
    %190 = math.tanh %189 : vector<1x32xf32>
    %cst_42 = arith.constant 1.000000e+00 : f32
    %191 = vector.broadcast %cst_42 : f32 to vector<1x32xf32>
    %192 = arith.subf %191, %185 : vector<1x32xf32>
    %193 = arith.mulf %192, %190 : vector<1x32xf32>
    %194 = arith.mulf %185, %137 : vector<1x32xf32>
    %195 = arith.addf %193, %194 : vector<1x32xf32>
    %196 = vector.extract_strided_slice %14 {offsets = [3, 0], sizes = [1, 96], strides = [1, 1]} : vector<8x96xf32> to vector<1x96xf32>
    %cst_43 = arith.constant dense<0.000000e+00> : vector<1x96xf32>
    %197 = tpu.matmul %166, %16, %cst_43 {dimension_numbers = #tpu.dot_dimension_numbers<[1], [0], [0], [1], [0, 0, 1, 1], [], []>} : vector<1x32xf32>, vector<32x96xf32>, vector<1x96xf32> -> vector<1x96xf32>
    %198 = arith.addf %197, %18 : vector<1x96xf32>
    %199 = vector.extract_strided_slice %196 {offsets = [0, 0], sizes = [1, 32], strides = [1, 1]} : vector<1x96xf32> to vector<1x32xf32>
    %200 = vector.extract_strided_slice %198 {offsets = [0, 0], sizes = [1, 32], strides = [1, 1]} : vector<1x96xf32> to vector<1x32xf32>
    %201 = arith.addf %199, %200 : vector<1x32xf32>
    %202 = arith.negf %201 : vector<1x32xf32>
    %203 = math.exp %202 : vector<1x32xf32>
    %cst_44 = arith.constant 1.000000e+00 : f32
    %204 = vector.broadcast %cst_44 : f32 to vector<1x32xf32>
    %205 = arith.addf %204, %203 : vector<1x32xf32>
    %206 = arith.divf %204, %205 : vector<1x32xf32>
    %207 = vector.extract_strided_slice %196 {offsets = [0, 32], sizes = [1, 32], strides = [1, 1]} : vector<1x96xf32> to vector<1x32xf32>
    %208 = vector.extract_strided_slice %198 {offsets = [0, 32], sizes = [1, 32], strides = [1, 1]} : vector<1x96xf32> to vector<1x32xf32>
    %209 = arith.addf %207, %208 : vector<1x32xf32>
    %210 = arith.negf %209 : vector<1x32xf32>
    %211 = math.exp %210 : vector<1x32xf32>
    %cst_45 = arith.constant 1.000000e+00 : f32
    %212 = vector.broadcast %cst_45 : f32 to vector<1x32xf32>
    %213 = arith.addf %212, %211 : vector<1x32xf32>
    %214 = arith.divf %212, %213 : vector<1x32xf32>
    %215 = vector.extract_strided_slice %196 {offsets = [0, 64], sizes = [1, 32], strides = [1, 1]} : vector<1x96xf32> to vector<1x32xf32>
    %216 = vector.extract_strided_slice %198 {offsets = [0, 64], sizes = [1, 32], strides = [1, 1]} : vector<1x96xf32> to vector<1x32xf32>
    %217 = arith.mulf %206, %216 : vector<1x32xf32>
    %218 = arith.addf %215, %217 : vector<1x32xf32>
    %219 = math.tanh %218 : vector<1x32xf32>
    %cst_46 = arith.constant 1.000000e+00 : f32
    %220 = vector.broadcast %cst_46 : f32 to vector<1x32xf32>
    %221 = arith.subf %220, %214 : vector<1x32xf32>
    %222 = arith.mulf %221, %219 : vector<1x32xf32>
    %223 = arith.mulf %214, %166 : vector<1x32xf32>
    %224 = arith.addf %222, %223 : vector<1x32xf32>
    %225 = vector.extract_strided_slice %15 {offsets = [4, 0], sizes = [1, 96], strides = [1, 1]} : vector<8x96xf32> to vector<1x96xf32>
    %cst_47 = arith.constant dense<0.000000e+00> : vector<1x96xf32>
    %226 = tpu.matmul %195, %17, %cst_47 {dimension_numbers = #tpu.dot_dimension_numbers<[1], [0], [0], [1], [0, 0, 1, 1], [], []>} : vector<1x32xf32>, vector<32x96xf32>, vector<1x96xf32> -> vector<1x96xf32>
    %227 = arith.addf %226, %19 : vector<1x96xf32>
    %228 = vector.extract_strided_slice %225 {offsets = [0, 0], sizes = [1, 32], strides = [1, 1]} : vector<1x96xf32> to vector<1x32xf32>
    %229 = vector.extract_strided_slice %227 {offsets = [0, 0], sizes = [1, 32], strides = [1, 1]} : vector<1x96xf32> to vector<1x32xf32>
    %230 = arith.addf %228, %229 : vector<1x32xf32>
    %231 = arith.negf %230 : vector<1x32xf32>
    %232 = math.exp %231 : vector<1x32xf32>
    %cst_48 = arith.constant 1.000000e+00 : f32
    %233 = vector.broadcast %cst_48 : f32 to vector<1x32xf32>
    %234 = arith.addf %233, %232 : vector<1x32xf32>
    %235 = arith.divf %233, %234 : vector<1x32xf32>
    %236 = vector.extract_strided_slice %225 {offsets = [0, 32], sizes = [1, 32], strides = [1, 1]} : vector<1x96xf32> to vector<1x32xf32>
    %237 = vector.extract_strided_slice %227 {offsets = [0, 32], sizes = [1, 32], strides = [1, 1]} : vector<1x96xf32> to vector<1x32xf32>
    %238 = arith.addf %236, %237 : vector<1x32xf32>
    %239 = arith.negf %238 : vector<1x32xf32>
    %240 = math.exp %239 : vector<1x32xf32>
    %cst_49 = arith.constant 1.000000e+00 : f32
    %241 = vector.broadcast %cst_49 : f32 to vector<1x32xf32>
    %242 = arith.addf %241, %240 : vector<1x32xf32>
    %243 = arith.divf %241, %242 : vector<1x32xf32>
    %244 = vector.extract_strided_slice %225 {offsets = [0, 64], sizes = [1, 32], strides = [1, 1]} : vector<1x96xf32> to vector<1x32xf32>
    %245 = vector.extract_strided_slice %227 {offsets = [0, 64], sizes = [1, 32], strides = [1, 1]} : vector<1x96xf32> to vector<1x32xf32>
    %246 = arith.mulf %235, %245 : vector<1x32xf32>
    %247 = arith.addf %244, %246 : vector<1x32xf32>
    %248 = math.tanh %247 : vector<1x32xf32>
    %cst_50 = arith.constant 1.000000e+00 : f32
    %249 = vector.broadcast %cst_50 : f32 to vector<1x32xf32>
    %250 = arith.subf %249, %243 : vector<1x32xf32>
    %251 = arith.mulf %250, %248 : vector<1x32xf32>
    %252 = arith.mulf %243, %195 : vector<1x32xf32>
    %253 = arith.addf %251, %252 : vector<1x32xf32>
    %254 = vector.extract_strided_slice %14 {offsets = [4, 0], sizes = [1, 96], strides = [1, 1]} : vector<8x96xf32> to vector<1x96xf32>
    %cst_51 = arith.constant dense<0.000000e+00> : vector<1x96xf32>
    %255 = tpu.matmul %224, %16, %cst_51 {dimension_numbers = #tpu.dot_dimension_numbers<[1], [0], [0], [1], [0, 0, 1, 1], [], []>} : vector<1x32xf32>, vector<32x96xf32>, vector<1x96xf32> -> vector<1x96xf32>
    %256 = arith.addf %255, %18 : vector<1x96xf32>
    %257 = vector.extract_strided_slice %254 {offsets = [0, 0], sizes = [1, 32], strides = [1, 1]} : vector<1x96xf32> to vector<1x32xf32>
    %258 = vector.extract_strided_slice %256 {offsets = [0, 0], sizes = [1, 32], strides = [1, 1]} : vector<1x96xf32> to vector<1x32xf32>
    %259 = arith.addf %257, %258 : vector<1x32xf32>
    %260 = arith.negf %259 : vector<1x32xf32>
    %261 = math.exp %260 : vector<1x32xf32>
    %cst_52 = arith.constant 1.000000e+00 : f32
    %262 = vector.broadcast %cst_52 : f32 to vector<1x32xf32>
    %263 = arith.addf %262, %261 : vector<1x32xf32>
    %264 = arith.divf %262, %263 : vector<1x32xf32>
    %265 = vector.extract_strided_slice %254 {offsets = [0, 32], sizes = [1, 32], strides = [1, 1]} : vector<1x96xf32> to vector<1x32xf32>
    %266 = vector.extract_strided_slice %256 {offsets = [0, 32], sizes = [1, 32], strides = [1, 1]} : vector<1x96xf32> to vector<1x32xf32>
    %267 = arith.addf %265, %266 : vector<1x32xf32>
    %268 = arith.negf %267 : vector<1x32xf32>
    %269 = math.exp %268 : vector<1x32xf32>
    %cst_53 = arith.constant 1.000000e+00 : f32
    %270 = vector.broadcast %cst_53 : f32 to vector<1x32xf32>
    %271 = arith.addf %270, %269 : vector<1x32xf32>
    %272 = arith.divf %270, %271 : vector<1x32xf32>
    %273 = vector.extract_strided_slice %254 {offsets = [0, 64], sizes = [1, 32], strides = [1, 1]} : vector<1x96xf32> to vector<1x32xf32>
    %274 = vector.extract_strided_slice %256 {offsets = [0, 64], sizes = [1, 32], strides = [1, 1]} : vector<1x96xf32> to vector<1x32xf32>
    %275 = arith.mulf %264, %274 : vector<1x32xf32>
    %276 = arith.addf %273, %275 : vector<1x32xf32>
    %277 = math.tanh %276 : vector<1x32xf32>
    %cst_54 = arith.constant 1.000000e+00 : f32
    %278 = vector.broadcast %cst_54 : f32 to vector<1x32xf32>
    %279 = arith.subf %278, %272 : vector<1x32xf32>
    %280 = arith.mulf %279, %277 : vector<1x32xf32>
    %281 = arith.mulf %272, %224 : vector<1x32xf32>
    %282 = arith.addf %280, %281 : vector<1x32xf32>
    %283 = vector.extract_strided_slice %15 {offsets = [3, 0], sizes = [1, 96], strides = [1, 1]} : vector<8x96xf32> to vector<1x96xf32>
    %cst_55 = arith.constant dense<0.000000e+00> : vector<1x96xf32>
    %284 = tpu.matmul %253, %17, %cst_55 {dimension_numbers = #tpu.dot_dimension_numbers<[1], [0], [0], [1], [0, 0, 1, 1], [], []>} : vector<1x32xf32>, vector<32x96xf32>, vector<1x96xf32> -> vector<1x96xf32>
    %285 = arith.addf %284, %19 : vector<1x96xf32>
    %286 = vector.extract_strided_slice %283 {offsets = [0, 0], sizes = [1, 32], strides = [1, 1]} : vector<1x96xf32> to vector<1x32xf32>
    %287 = vector.extract_strided_slice %285 {offsets = [0, 0], sizes = [1, 32], strides = [1, 1]} : vector<1x96xf32> to vector<1x32xf32>
    %288 = arith.addf %286, %287 : vector<1x32xf32>
    %289 = arith.negf %288 : vector<1x32xf32>
    %290 = math.exp %289 : vector<1x32xf32>
    %cst_56 = arith.constant 1.000000e+00 : f32
    %291 = vector.broadcast %cst_56 : f32 to vector<1x32xf32>
    %292 = arith.addf %291, %290 : vector<1x32xf32>
    %293 = arith.divf %291, %292 : vector<1x32xf32>
    %294 = vector.extract_strided_slice %283 {offsets = [0, 32], sizes = [1, 32], strides = [1, 1]} : vector<1x96xf32> to vector<1x32xf32>
    %295 = vector.extract_strided_slice %285 {offsets = [0, 32], sizes = [1, 32], strides = [1, 1]} : vector<1x96xf32> to vector<1x32xf32>
    %296 = arith.addf %294, %295 : vector<1x32xf32>
    %297 = arith.negf %296 : vector<1x32xf32>
    %298 = math.exp %297 : vector<1x32xf32>
    %cst_57 = arith.constant 1.000000e+00 : f32
    %299 = vector.broadcast %cst_57 : f32 to vector<1x32xf32>
    %300 = arith.addf %299, %298 : vector<1x32xf32>
    %301 = arith.divf %299, %300 : vector<1x32xf32>
    %302 = vector.extract_strided_slice %283 {offsets = [0, 64], sizes = [1, 32], strides = [1, 1]} : vector<1x96xf32> to vector<1x32xf32>
    %303 = vector.extract_strided_slice %285 {offsets = [0, 64], sizes = [1, 32], strides = [1, 1]} : vector<1x96xf32> to vector<1x32xf32>
    %304 = arith.mulf %293, %303 : vector<1x32xf32>
    %305 = arith.addf %302, %304 : vector<1x32xf32>
    %306 = math.tanh %305 : vector<1x32xf32>
    %cst_58 = arith.constant 1.000000e+00 : f32
    %307 = vector.broadcast %cst_58 : f32 to vector<1x32xf32>
    %308 = arith.subf %307, %301 : vector<1x32xf32>
    %309 = arith.mulf %308, %306 : vector<1x32xf32>
    %310 = arith.mulf %301, %253 : vector<1x32xf32>
    %311 = arith.addf %309, %310 : vector<1x32xf32>
    %312 = vector.extract_strided_slice %14 {offsets = [5, 0], sizes = [1, 96], strides = [1, 1]} : vector<8x96xf32> to vector<1x96xf32>
    %cst_59 = arith.constant dense<0.000000e+00> : vector<1x96xf32>
    %313 = tpu.matmul %282, %16, %cst_59 {dimension_numbers = #tpu.dot_dimension_numbers<[1], [0], [0], [1], [0, 0, 1, 1], [], []>} : vector<1x32xf32>, vector<32x96xf32>, vector<1x96xf32> -> vector<1x96xf32>
    %314 = arith.addf %313, %18 : vector<1x96xf32>
    %315 = vector.extract_strided_slice %312 {offsets = [0, 0], sizes = [1, 32], strides = [1, 1]} : vector<1x96xf32> to vector<1x32xf32>
    %316 = vector.extract_strided_slice %314 {offsets = [0, 0], sizes = [1, 32], strides = [1, 1]} : vector<1x96xf32> to vector<1x32xf32>
    %317 = arith.addf %315, %316 : vector<1x32xf32>
    %318 = arith.negf %317 : vector<1x32xf32>
    %319 = math.exp %318 : vector<1x32xf32>
    %cst_60 = arith.constant 1.000000e+00 : f32
    %320 = vector.broadcast %cst_60 : f32 to vector<1x32xf32>
    %321 = arith.addf %320, %319 : vector<1x32xf32>
    %322 = arith.divf %320, %321 : vector<1x32xf32>
    %323 = vector.extract_strided_slice %312 {offsets = [0, 32], sizes = [1, 32], strides = [1, 1]} : vector<1x96xf32> to vector<1x32xf32>
    %324 = vector.extract_strided_slice %314 {offsets = [0, 32], sizes = [1, 32], strides = [1, 1]} : vector<1x96xf32> to vector<1x32xf32>
    %325 = arith.addf %323, %324 : vector<1x32xf32>
    %326 = arith.negf %325 : vector<1x32xf32>
    %327 = math.exp %326 : vector<1x32xf32>
    %cst_61 = arith.constant 1.000000e+00 : f32
    %328 = vector.broadcast %cst_61 : f32 to vector<1x32xf32>
    %329 = arith.addf %328, %327 : vector<1x32xf32>
    %330 = arith.divf %328, %329 : vector<1x32xf32>
    %331 = vector.extract_strided_slice %312 {offsets = [0, 64], sizes = [1, 32], strides = [1, 1]} : vector<1x96xf32> to vector<1x32xf32>
    %332 = vector.extract_strided_slice %314 {offsets = [0, 64], sizes = [1, 32], strides = [1, 1]} : vector<1x96xf32> to vector<1x32xf32>
    %333 = arith.mulf %322, %332 : vector<1x32xf32>
    %334 = arith.addf %331, %333 : vector<1x32xf32>
    %335 = math.tanh %334 : vector<1x32xf32>
    %cst_62 = arith.constant 1.000000e+00 : f32
    %336 = vector.broadcast %cst_62 : f32 to vector<1x32xf32>
    %337 = arith.subf %336, %330 : vector<1x32xf32>
    %338 = arith.mulf %337, %335 : vector<1x32xf32>
    %339 = arith.mulf %330, %282 : vector<1x32xf32>
    %340 = arith.addf %338, %339 : vector<1x32xf32>
    %341 = vector.extract_strided_slice %15 {offsets = [2, 0], sizes = [1, 96], strides = [1, 1]} : vector<8x96xf32> to vector<1x96xf32>
    %cst_63 = arith.constant dense<0.000000e+00> : vector<1x96xf32>
    %342 = tpu.matmul %311, %17, %cst_63 {dimension_numbers = #tpu.dot_dimension_numbers<[1], [0], [0], [1], [0, 0, 1, 1], [], []>} : vector<1x32xf32>, vector<32x96xf32>, vector<1x96xf32> -> vector<1x96xf32>
    %343 = arith.addf %342, %19 : vector<1x96xf32>
    %344 = vector.extract_strided_slice %341 {offsets = [0, 0], sizes = [1, 32], strides = [1, 1]} : vector<1x96xf32> to vector<1x32xf32>
    %345 = vector.extract_strided_slice %343 {offsets = [0, 0], sizes = [1, 32], strides = [1, 1]} : vector<1x96xf32> to vector<1x32xf32>
    %346 = arith.addf %344, %345 : vector<1x32xf32>
    %347 = arith.negf %346 : vector<1x32xf32>
    %348 = math.exp %347 : vector<1x32xf32>
    %cst_64 = arith.constant 1.000000e+00 : f32
    %349 = vector.broadcast %cst_64 : f32 to vector<1x32xf32>
    %350 = arith.addf %349, %348 : vector<1x32xf32>
    %351 = arith.divf %349, %350 : vector<1x32xf32>
    %352 = vector.extract_strided_slice %341 {offsets = [0, 32], sizes = [1, 32], strides = [1, 1]} : vector<1x96xf32> to vector<1x32xf32>
    %353 = vector.extract_strided_slice %343 {offsets = [0, 32], sizes = [1, 32], strides = [1, 1]} : vector<1x96xf32> to vector<1x32xf32>
    %354 = arith.addf %352, %353 : vector<1x32xf32>
    %355 = arith.negf %354 : vector<1x32xf32>
    %356 = math.exp %355 : vector<1x32xf32>
    %cst_65 = arith.constant 1.000000e+00 : f32
    %357 = vector.broadcast %cst_65 : f32 to vector<1x32xf32>
    %358 = arith.addf %357, %356 : vector<1x32xf32>
    %359 = arith.divf %357, %358 : vector<1x32xf32>
    %360 = vector.extract_strided_slice %341 {offsets = [0, 64], sizes = [1, 32], strides = [1, 1]} : vector<1x96xf32> to vector<1x32xf32>
    %361 = vector.extract_strided_slice %343 {offsets = [0, 64], sizes = [1, 32], strides = [1, 1]} : vector<1x96xf32> to vector<1x32xf32>
    %362 = arith.mulf %351, %361 : vector<1x32xf32>
    %363 = arith.addf %360, %362 : vector<1x32xf32>
    %364 = math.tanh %363 : vector<1x32xf32>
    %cst_66 = arith.constant 1.000000e+00 : f32
    %365 = vector.broadcast %cst_66 : f32 to vector<1x32xf32>
    %366 = arith.subf %365, %359 : vector<1x32xf32>
    %367 = arith.mulf %366, %364 : vector<1x32xf32>
    %368 = arith.mulf %359, %311 : vector<1x32xf32>
    %369 = arith.addf %367, %368 : vector<1x32xf32>
    %370 = vector.extract_strided_slice %14 {offsets = [6, 0], sizes = [1, 96], strides = [1, 1]} : vector<8x96xf32> to vector<1x96xf32>
    %cst_67 = arith.constant dense<0.000000e+00> : vector<1x96xf32>
    %371 = tpu.matmul %340, %16, %cst_67 {dimension_numbers = #tpu.dot_dimension_numbers<[1], [0], [0], [1], [0, 0, 1, 1], [], []>} : vector<1x32xf32>, vector<32x96xf32>, vector<1x96xf32> -> vector<1x96xf32>
    %372 = arith.addf %371, %18 : vector<1x96xf32>
    %373 = vector.extract_strided_slice %370 {offsets = [0, 0], sizes = [1, 32], strides = [1, 1]} : vector<1x96xf32> to vector<1x32xf32>
    %374 = vector.extract_strided_slice %372 {offsets = [0, 0], sizes = [1, 32], strides = [1, 1]} : vector<1x96xf32> to vector<1x32xf32>
    %375 = arith.addf %373, %374 : vector<1x32xf32>
    %376 = arith.negf %375 : vector<1x32xf32>
    %377 = math.exp %376 : vector<1x32xf32>
    %cst_68 = arith.constant 1.000000e+00 : f32
    %378 = vector.broadcast %cst_68 : f32 to vector<1x32xf32>
    %379 = arith.addf %378, %377 : vector<1x32xf32>
    %380 = arith.divf %378, %379 : vector<1x32xf32>
    %381 = vector.extract_strided_slice %370 {offsets = [0, 32], sizes = [1, 32], strides = [1, 1]} : vector<1x96xf32> to vector<1x32xf32>
    %382 = vector.extract_strided_slice %372 {offsets = [0, 32], sizes = [1, 32], strides = [1, 1]} : vector<1x96xf32> to vector<1x32xf32>
    %383 = arith.addf %381, %382 : vector<1x32xf32>
    %384 = arith.negf %383 : vector<1x32xf32>
    %385 = math.exp %384 : vector<1x32xf32>
    %cst_69 = arith.constant 1.000000e+00 : f32
    %386 = vector.broadcast %cst_69 : f32 to vector<1x32xf32>
    %387 = arith.addf %386, %385 : vector<1x32xf32>
    %388 = arith.divf %386, %387 : vector<1x32xf32>
    %389 = vector.extract_strided_slice %370 {offsets = [0, 64], sizes = [1, 32], strides = [1, 1]} : vector<1x96xf32> to vector<1x32xf32>
    %390 = vector.extract_strided_slice %372 {offsets = [0, 64], sizes = [1, 32], strides = [1, 1]} : vector<1x96xf32> to vector<1x32xf32>
    %391 = arith.mulf %380, %390 : vector<1x32xf32>
    %392 = arith.addf %389, %391 : vector<1x32xf32>
    %393 = math.tanh %392 : vector<1x32xf32>
    %cst_70 = arith.constant 1.000000e+00 : f32
    %394 = vector.broadcast %cst_70 : f32 to vector<1x32xf32>
    %395 = arith.subf %394, %388 : vector<1x32xf32>
    %396 = arith.mulf %395, %393 : vector<1x32xf32>
    %397 = arith.mulf %388, %340 : vector<1x32xf32>
    %398 = arith.addf %396, %397 : vector<1x32xf32>
    %399 = vector.extract_strided_slice %15 {offsets = [1, 0], sizes = [1, 96], strides = [1, 1]} : vector<8x96xf32> to vector<1x96xf32>
    %cst_71 = arith.constant dense<0.000000e+00> : vector<1x96xf32>
    %400 = tpu.matmul %369, %17, %cst_71 {dimension_numbers = #tpu.dot_dimension_numbers<[1], [0], [0], [1], [0, 0, 1, 1], [], []>} : vector<1x32xf32>, vector<32x96xf32>, vector<1x96xf32> -> vector<1x96xf32>
    %401 = arith.addf %400, %19 : vector<1x96xf32>
    %402 = vector.extract_strided_slice %399 {offsets = [0, 0], sizes = [1, 32], strides = [1, 1]} : vector<1x96xf32> to vector<1x32xf32>
    %403 = vector.extract_strided_slice %401 {offsets = [0, 0], sizes = [1, 32], strides = [1, 1]} : vector<1x96xf32> to vector<1x32xf32>
    %404 = arith.addf %402, %403 : vector<1x32xf32>
    %405 = arith.negf %404 : vector<1x32xf32>
    %406 = math.exp %405 : vector<1x32xf32>
    %cst_72 = arith.constant 1.000000e+00 : f32
    %407 = vector.broadcast %cst_72 : f32 to vector<1x32xf32>
    %408 = arith.addf %407, %406 : vector<1x32xf32>
    %409 = arith.divf %407, %408 : vector<1x32xf32>
    %410 = vector.extract_strided_slice %399 {offsets = [0, 32], sizes = [1, 32], strides = [1, 1]} : vector<1x96xf32> to vector<1x32xf32>
    %411 = vector.extract_strided_slice %401 {offsets = [0, 32], sizes = [1, 32], strides = [1, 1]} : vector<1x96xf32> to vector<1x32xf32>
    %412 = arith.addf %410, %411 : vector<1x32xf32>
    %413 = arith.negf %412 : vector<1x32xf32>
    %414 = math.exp %413 : vector<1x32xf32>
    %cst_73 = arith.constant 1.000000e+00 : f32
    %415 = vector.broadcast %cst_73 : f32 to vector<1x32xf32>
    %416 = arith.addf %415, %414 : vector<1x32xf32>
    %417 = arith.divf %415, %416 : vector<1x32xf32>
    %418 = vector.extract_strided_slice %399 {offsets = [0, 64], sizes = [1, 32], strides = [1, 1]} : vector<1x96xf32> to vector<1x32xf32>
    %419 = vector.extract_strided_slice %401 {offsets = [0, 64], sizes = [1, 32], strides = [1, 1]} : vector<1x96xf32> to vector<1x32xf32>
    %420 = arith.mulf %409, %419 : vector<1x32xf32>
    %421 = arith.addf %418, %420 : vector<1x32xf32>
    %422 = math.tanh %421 : vector<1x32xf32>
    %cst_74 = arith.constant 1.000000e+00 : f32
    %423 = vector.broadcast %cst_74 : f32 to vector<1x32xf32>
    %424 = arith.subf %423, %417 : vector<1x32xf32>
    %425 = arith.mulf %424, %422 : vector<1x32xf32>
    %426 = arith.mulf %417, %369 : vector<1x32xf32>
    %427 = arith.addf %425, %426 : vector<1x32xf32>
    %428 = vector.extract_strided_slice %14 {offsets = [7, 0], sizes = [1, 96], strides = [1, 1]} : vector<8x96xf32> to vector<1x96xf32>
    %cst_75 = arith.constant dense<0.000000e+00> : vector<1x96xf32>
    %429 = tpu.matmul %398, %16, %cst_75 {dimension_numbers = #tpu.dot_dimension_numbers<[1], [0], [0], [1], [0, 0, 1, 1], [], []>} : vector<1x32xf32>, vector<32x96xf32>, vector<1x96xf32> -> vector<1x96xf32>
    %430 = arith.addf %429, %18 : vector<1x96xf32>
    %431 = vector.extract_strided_slice %428 {offsets = [0, 0], sizes = [1, 32], strides = [1, 1]} : vector<1x96xf32> to vector<1x32xf32>
    %432 = vector.extract_strided_slice %430 {offsets = [0, 0], sizes = [1, 32], strides = [1, 1]} : vector<1x96xf32> to vector<1x32xf32>
    %433 = arith.addf %431, %432 : vector<1x32xf32>
    %434 = arith.negf %433 : vector<1x32xf32>
    %435 = math.exp %434 : vector<1x32xf32>
    %cst_76 = arith.constant 1.000000e+00 : f32
    %436 = vector.broadcast %cst_76 : f32 to vector<1x32xf32>
    %437 = arith.addf %436, %435 : vector<1x32xf32>
    %438 = arith.divf %436, %437 : vector<1x32xf32>
    %439 = vector.extract_strided_slice %428 {offsets = [0, 32], sizes = [1, 32], strides = [1, 1]} : vector<1x96xf32> to vector<1x32xf32>
    %440 = vector.extract_strided_slice %430 {offsets = [0, 32], sizes = [1, 32], strides = [1, 1]} : vector<1x96xf32> to vector<1x32xf32>
    %441 = arith.addf %439, %440 : vector<1x32xf32>
    %442 = arith.negf %441 : vector<1x32xf32>
    %443 = math.exp %442 : vector<1x32xf32>
    %cst_77 = arith.constant 1.000000e+00 : f32
    %444 = vector.broadcast %cst_77 : f32 to vector<1x32xf32>
    %445 = arith.addf %444, %443 : vector<1x32xf32>
    %446 = arith.divf %444, %445 : vector<1x32xf32>
    %447 = vector.extract_strided_slice %428 {offsets = [0, 64], sizes = [1, 32], strides = [1, 1]} : vector<1x96xf32> to vector<1x32xf32>
    %448 = vector.extract_strided_slice %430 {offsets = [0, 64], sizes = [1, 32], strides = [1, 1]} : vector<1x96xf32> to vector<1x32xf32>
    %449 = arith.mulf %438, %448 : vector<1x32xf32>
    %450 = arith.addf %447, %449 : vector<1x32xf32>
    %451 = math.tanh %450 : vector<1x32xf32>
    %cst_78 = arith.constant 1.000000e+00 : f32
    %452 = vector.broadcast %cst_78 : f32 to vector<1x32xf32>
    %453 = arith.subf %452, %446 : vector<1x32xf32>
    %454 = arith.mulf %453, %451 : vector<1x32xf32>
    %455 = arith.mulf %446, %398 : vector<1x32xf32>
    %456 = arith.addf %454, %455 : vector<1x32xf32>
    %457 = vector.extract_strided_slice %15 {offsets = [0, 0], sizes = [1, 96], strides = [1, 1]} : vector<8x96xf32> to vector<1x96xf32>
    %cst_79 = arith.constant dense<0.000000e+00> : vector<1x96xf32>
    %458 = tpu.matmul %427, %17, %cst_79 {dimension_numbers = #tpu.dot_dimension_numbers<[1], [0], [0], [1], [0, 0, 1, 1], [], []>} : vector<1x32xf32>, vector<32x96xf32>, vector<1x96xf32> -> vector<1x96xf32>
    %459 = arith.addf %458, %19 : vector<1x96xf32>
    %460 = vector.extract_strided_slice %457 {offsets = [0, 0], sizes = [1, 32], strides = [1, 1]} : vector<1x96xf32> to vector<1x32xf32>
    %461 = vector.extract_strided_slice %459 {offsets = [0, 0], sizes = [1, 32], strides = [1, 1]} : vector<1x96xf32> to vector<1x32xf32>
    %462 = arith.addf %460, %461 : vector<1x32xf32>
    %463 = arith.negf %462 : vector<1x32xf32>
    %464 = math.exp %463 : vector<1x32xf32>
    %cst_80 = arith.constant 1.000000e+00 : f32
    %465 = vector.broadcast %cst_80 : f32 to vector<1x32xf32>
    %466 = arith.addf %465, %464 : vector<1x32xf32>
    %467 = arith.divf %465, %466 : vector<1x32xf32>
    %468 = vector.extract_strided_slice %457 {offsets = [0, 32], sizes = [1, 32], strides = [1, 1]} : vector<1x96xf32> to vector<1x32xf32>
    %469 = vector.extract_strided_slice %459 {offsets = [0, 32], sizes = [1, 32], strides = [1, 1]} : vector<1x96xf32> to vector<1x32xf32>
    %470 = arith.addf %468, %469 : vector<1x32xf32>
    %471 = arith.negf %470 : vector<1x32xf32>
    %472 = math.exp %471 : vector<1x32xf32>
    %cst_81 = arith.constant 1.000000e+00 : f32
    %473 = vector.broadcast %cst_81 : f32 to vector<1x32xf32>
    %474 = arith.addf %473, %472 : vector<1x32xf32>
    %475 = arith.divf %473, %474 : vector<1x32xf32>
    %476 = vector.extract_strided_slice %457 {offsets = [0, 64], sizes = [1, 32], strides = [1, 1]} : vector<1x96xf32> to vector<1x32xf32>
    %477 = vector.extract_strided_slice %459 {offsets = [0, 64], sizes = [1, 32], strides = [1, 1]} : vector<1x96xf32> to vector<1x32xf32>
    %478 = arith.mulf %467, %477 : vector<1x32xf32>
    %479 = arith.addf %476, %478 : vector<1x32xf32>
    %480 = math.tanh %479 : vector<1x32xf32>
    %cst_82 = arith.constant 1.000000e+00 : f32
    %481 = vector.broadcast %cst_82 : f32 to vector<1x32xf32>
    %482 = arith.subf %481, %475 : vector<1x32xf32>
    %483 = arith.mulf %482, %480 : vector<1x32xf32>
    %484 = arith.mulf %475, %427 : vector<1x32xf32>
    %485 = arith.addf %483, %484 : vector<1x32xf32>
    %486 = tpu.concatenate %50, %108, %166, %224, %282, %340, %398, %456 in 0 : vector<1x32xf32>, vector<1x32xf32>, vector<1x32xf32>, vector<1x32xf32>, vector<1x32xf32>, vector<1x32xf32>, vector<1x32xf32>, vector<1x32xf32> -> vector<8x32xf32>
    %487 = tpu.concatenate %485, %427, %369, %311, %253, %195, %137, %79 in 0 : vector<1x32xf32>, vector<1x32xf32>, vector<1x32xf32>, vector<1x32xf32>, vector<1x32xf32>, vector<1x32xf32>, vector<1x32xf32>, vector<1x32xf32> -> vector<8x32xf32>
    %488 = tpu.concatenate %486, %487 in 1 : vector<8x32xf32>, vector<8x32xf32> -> vector<8x64xf32>
    %c0_83 = arith.constant 0 : index
    %c0_84 = arith.constant 0 : index
    %489 = vector.load %arg9[%c0_83, %c0_84] : memref<64x8xf32, #tpu.memory_space<vmem>>, vector<64x8xf32>
    %cst_85 = arith.constant dense<0.000000e+00> : vector<8x8xf32>
    %490 = tpu.matmul %488, %489, %cst_85 {dimension_numbers = #tpu.dot_dimension_numbers<[1], [0], [0], [1], [0, 0, 1, 1], [], []>} : vector<8x64xf32>, vector<64x8xf32>, vector<8x8xf32> -> vector<8x8xf32>
    %c0_86 = arith.constant 0 : index
    %c0_87 = arith.constant 0 : index
    %491 = vector.load %arg10[%c0_86, %c0_87] : memref<1x8xf32, #tpu.memory_space<vmem>>, vector<1x8xf32>
    %492 = vector.broadcast %491 : vector<1x8xf32> to vector<8x8xf32>
    %493 = arith.addf %490, %492 : vector<8x8xf32>
    %cst_88 = arith.constant dense<0xFF800000> : vector<8xf32>
    %494 = vector.multi_reduction <maximumf>, %493, %cst_88 [0] : vector<8x8xf32> to vector<8xf32>
    %495 = vector.shape_cast %494 : vector<8xf32> to vector<1x8xf32>
    %496 = vector.broadcast %495 : vector<1x8xf32> to vector<8x8xf32>
    %497 = arith.subf %493, %496 : vector<8x8xf32>
    %498 = math.exp %497 : vector<8x8xf32>
    %cst_89 = arith.constant dense<0.000000e+00> : vector<8xf32>
    %499 = vector.multi_reduction <add>, %498, %cst_89 [0] : vector<8x8xf32> to vector<8xf32>
    %500 = vector.shape_cast %499 : vector<8xf32> to vector<1x8xf32>
    %501 = vector.broadcast %500 : vector<1x8xf32> to vector<8x8xf32>
    %502 = arith.divf %498, %501 : vector<8x8xf32>
    %cst_90 = arith.constant dense<0.000000e+00> : vector<8xf32>
    %503 = vector.multi_reduction <add>, %502, %cst_90 [0] : vector<8x8xf32> to vector<8xf32>
    %504 = vector.shape_cast %503 : vector<8xf32> to vector<1x8xf32>
    %cst_91 = arith.constant dense<0.000000e+00> : vector<1x64xf32>
    %505 = tpu.matmul %504, %488, %cst_91 {dimension_numbers = #tpu.dot_dimension_numbers<[1], [0], [0], [1], [0, 0, 1, 1], [], []>} : vector<1x8xf32>, vector<8x64xf32>, vector<1x64xf32> -> vector<1x64xf32>
    %506 = tpu.concatenate %505, %456, %79 in 1 : vector<1x64xf32>, vector<1x32xf32>, vector<1x32xf32> -> vector<1x128xf32>
    %c0_92 = arith.constant 0 : index
    %c0_93 = arith.constant 0 : index
    %507 = vector.load %arg11[%c0_92, %c0_93] : memref<128x32xf32, #tpu.memory_space<vmem>>, vector<128x32xf32>
    %cst_94 = arith.constant dense<0.000000e+00> : vector<1x32xf32>
    %508 = tpu.matmul %506, %507, %cst_94 {dimension_numbers = #tpu.dot_dimension_numbers<[1], [0], [0], [1], [0, 0, 1, 1], [], []>} : vector<1x128xf32>, vector<128x32xf32>, vector<1x32xf32> -> vector<1x32xf32>
    %c0_95 = arith.constant 0 : index
    %c0_96 = arith.constant 0 : index
    %509 = vector.load %arg12[%c0_95, %c0_96] : memref<1x32xf32, #tpu.memory_space<vmem>>, vector<1x32xf32>
    %510 = arith.addf %508, %509 : vector<1x32xf32>
    %cst_97 = arith.constant 0.000000e+00 : f32
    %511 = vector.broadcast %cst_97 : f32 to vector<1x32xf32>
    %512 = arith.maximumf %510, %511 : vector<1x32xf32>
    %c0_98 = arith.constant 0 : index
    %c0_99 = arith.constant 0 : index
    %513 = vector.load %arg13[%c0_98, %c0_99] : memref<32x4xf32, #tpu.memory_space<vmem>>, vector<32x4xf32>
    %cst_100 = arith.constant dense<0.000000e+00> : vector<1x4xf32>
    %514 = tpu.matmul %512, %513, %cst_100 {dimension_numbers = #tpu.dot_dimension_numbers<[1], [0], [0], [1], [0, 0, 1, 1], [], []>} : vector<1x32xf32>, vector<32x4xf32>, vector<1x4xf32> -> vector<1x4xf32>
    %c0_101 = arith.constant 0 : index
    %c0_102 = arith.constant 0 : index
    %515 = vector.load %arg14[%c0_101, %c0_102] : memref<1x4xf32, #tpu.memory_space<vmem>>, vector<1x4xf32>
    %516 = arith.addf %514, %515 : vector<1x4xf32>
    %517 = arith.negf %516 : vector<1x4xf32>
    %518 = math.exp %517 : vector<1x4xf32>
    %cst_103 = arith.constant 1.000000e+00 : f32
    %519 = vector.broadcast %cst_103 : f32 to vector<1x4xf32>
    %520 = arith.addf %519, %518 : vector<1x4xf32>
    %521 = arith.divf %519, %520 : vector<1x4xf32>
    %c0_104 = arith.constant 0 : index
    %c0_105 = arith.constant 0 : index
    %c0_106 = arith.constant 0 : index
    %522 = vector.load %arg15[%c0_104, %c0_105, %c0_106] : memref<1x1x4xf32, #tpu.memory_space<vmem>>, vector<1x1x4xf32>
    %523 = vector.shape_cast %522 : vector<1x1x4xf32> to vector<1x4xf32>
    %524 = vector.shape_cast %521 : vector<1x4xf32> to vector<1x1x4xf32>
    tpu.vector_store %arg15[%c0_104, %c0_105, %c0_106], %524 {strides = array<i32>} : memref<1x1x4xf32, #tpu.memory_space<vmem>>, vector<1x1x4xf32>,
    return
  }
  func.func @transform_0(%arg0: i32) -> (i32, i32, i32) {
    %c0_i32 = arith.constant 0 : i32
    %c0_i32_0 = arith.constant 0 : i32
    %c0_i32_1 = arith.constant 0 : i32
    return %arg0, %c0_i32, %c0_i32_0 : i32, i32, i32
  }
  func.func @transform_1(%arg0: i32) -> (i32, i32) {
    %c0_i32 = arith.constant 0 : i32
    %c0_i32_0 = arith.constant 0 : i32
    %c0_i32_1 = arith.constant 0 : i32
    return %c0_i32, %c0_i32_0 : i32, i32
  }
  func.func @transform_2(%arg0: i32) -> (i32, i32) {
    %c0_i32 = arith.constant 0 : i32
    %c0_i32_0 = arith.constant 0 : i32
    %c0_i32_1 = arith.constant 0 : i32
    return %c0_i32, %c0_i32_0 : i32, i32
  }
  func.func @transform_3(%arg0: i32) -> (i32, i32) {
    %c0_i32 = arith.constant 0 : i32
    %c0_i32_0 = arith.constant 0 : i32
    %c0_i32_1 = arith.constant 0 : i32
    return %c0_i32, %c0_i32_0 : i32, i32
  }
  func.func @transform_4(%arg0: i32) -> (i32, i32) {
    %c0_i32 = arith.constant 0 : i32
    %c0_i32_0 = arith.constant 0 : i32
    %c0_i32_1 = arith.constant 0 : i32
    return %c0_i32, %c0_i32_0 : i32, i32
  }
  func.func @transform_5(%arg0: i32) -> (i32, i32) {
    %c0_i32 = arith.constant 0 : i32
    %c0_i32_0 = arith.constant 0 : i32
    %c0_i32_1 = arith.constant 0 : i32
    return %c0_i32, %c0_i32_0 : i32, i32
  }
  func.func @transform_6(%arg0: i32) -> (i32, i32) {
    %c0_i32 = arith.constant 0 : i32
    %c0_i32_0 = arith.constant 0 : i32
    %c0_i32_1 = arith.constant 0 : i32
    return %c0_i32, %c0_i32_0 : i32, i32
  }
  func.func @transform_7(%arg0: i32) -> (i32, i32) {
    %c0_i32 = arith.constant 0 : i32
    %c0_i32_0 = arith.constant 0 : i32
    %c0_i32_1 = arith.constant 0 : i32
    return %c0_i32, %c0_i32_0 : i32, i32
  }
  func.func @transform_8(%arg0: i32) -> (i32, i32) {
    %c0_i32 = arith.constant 0 : i32
    %c0_i32_0 = arith.constant 0 : i32
    %c0_i32_1 = arith.constant 0 : i32
    return %c0_i32, %c0_i32_0 : i32, i32
  }
  func.func @transform_9(%arg0: i32) -> (i32, i32) {
    %c0_i32 = arith.constant 0 : i32
    %c0_i32_0 = arith.constant 0 : i32
    %c0_i32_1 = arith.constant 0 : i32
    return %c0_i32, %c0_i32_0 : i32, i32
  }
  func.func @transform_10(%arg0: i32) -> (i32, i32) {
    %c0_i32 = arith.constant 0 : i32
    %c0_i32_0 = arith.constant 0 : i32
    %c0_i32_1 = arith.constant 0 : i32
    return %c0_i32, %c0_i32_0 : i32, i32
  }
  func.func @transform_11(%arg0: i32) -> (i32, i32) {
    %c0_i32 = arith.constant 0 : i32
    %c0_i32_0 = arith.constant 0 : i32
    %c0_i32_1 = arith.constant 0 : i32
    return %c0_i32, %c0_i32_0 : i32, i32
  }
  func.func @transform_12(%arg0: i32) -> (i32, i32) {
    %c0_i32 = arith.constant 0 : i32
    %c0_i32_0 = arith.constant 0 : i32
    %c0_i32_1 = arith.constant 0 : i32
    return %c0_i32, %c0_i32_0 : i32, i32
  }
  func.func @transform_13(%arg0: i32) -> (i32, i32) {
    %c0_i32 = arith.constant 0 : i32
    %c0_i32_0 = arith.constant 0 : i32
    %c0_i32_1 = arith.constant 0 : i32
    return %c0_i32, %c0_i32_0 : i32, i32
  }
  func.func @transform_14(%arg0: i32) -> (i32, i32, i32) {
    %c0_i32 = arith.constant 0 : i32
    %c0_i32_0 = arith.constant 0 : i32
    %c0_i32_1 = arith.constant 0 : i32
    return %arg0, %c0_i32, %c0_i32_0 : i32, i32, i32
  }
}

</mosaic_0001>

<llo_original>
// kernel: tpu_custom_call.1
$region0: #{tpu_custom_call.1}
  #allocation0 [shape = 'u32[]', space=smem, size = 0x4, offset = 0x4, fixed_abs, tag = 'smem constant byte address 0x4 - core index']
  #allocation1 [shape = 'u32[72,128]{1,0:T(1,128)}', space=vmem, size = 0x9000, scoped, tag = 'internal scratch']
  %s0 = inlined_call_operand.vmem [shape: s32[2,8,1], index: 0, kind: input, shape index: {}]
  %s1 = inlined_call_operand.vmem [shape: f32[50,32], index: 1, kind: input, shape index: {}]
  %s2 = inlined_call_operand.vmem [shape: f32[32,192], index: 2, kind: input, shape index: {}]
  %s3 = inlined_call_operand.vmem [shape: f32[1,192], index: 3, kind: input, shape index: {}]
  %s4 = inlined_call_operand.vmem [shape: f32[32,96], index: 4, kind: input, shape index: {}]
  %s5 = inlined_call_operand.vmem [shape: f32[1,96], index: 5, kind: input, shape index: {}]
  %s6 = inlined_call_operand.vmem [shape: f32[32,96], index: 6, kind: input, shape index: {}]
  %s7 = inlined_call_operand.vmem [shape: f32[1,96], index: 7, kind: input, shape index: {}]
  %s8 = inlined_call_operand.vmem [shape: f32[64,8], index: 8, kind: input, shape index: {}]
  %s9 = inlined_call_operand.vmem [shape: f32[1,8], index: 9, kind: input, shape index: {}]
  %s10 = inlined_call_operand.vmem [shape: f32[128,32], index: 10, kind: input, shape index: {}]
  %s11 = inlined_call_operand.vmem [shape: f32[1,32], index: 11, kind: input, shape index: {}]
  %s12 = inlined_call_operand.vmem [shape: f32[32,4], index: 12, kind: input, shape index: {}]
  %s13 = inlined_call_operand.vmem [shape: f32[1,4], index: 13, kind: input, shape index: {}]
  %s14 = inlined_call_operand.hbm [shape: f32[2,1,4], index: 14, kind: output, shape index: {}]
  %s15 = sld [smem:[#allocation0]]
  $region89: #{tpu_custom_call.1} parent=0
    _
  %s17 = ssub.s32 1, %s15
  %s18 = scalar_select 0, %s17, %s15
  $region1: #{tpu_custom_call.1} parent=0
    #allocation2 [shape = 'u8[1024]{0}', space=vmem, size = 0x400, scoped, tag = 'output window, operand 0']
    #allocation3 [shape = 's32[2]{0}', space=sflag, size = 0x8, scoped, tag = 'scoped memory for tpu_custom_call.1']
    %19 = vsyncpa [#allocation3], 0
    %s20 = scalar_lea.sflag [#allocation3], 1
    %21 = vsyncpa %s20, 0
    loop: start=0, step=1, limit=4
    $region2: #{tpu_custom_call.1} parent=1 // loop_pre_header
      _
    $region3: #{tpu_custom_call.1} parent=1 // loop_header
      %s23 = sphi 0, %s27
      %p24 = scmp.ge.s32.totalorder %s23, 4
      %s33 = sphi 0, %s35
      %s36 = sphi 0, %s33
      %s37 = sphi 0, %s36
      %s53 = sphi 0, %s37
      %s57 = sphi 0, %s57
      %s59 = sphi 0, %s57
      %s60 = sphi 0, %s59
      %s74 = sphi 0, %s60
      %s78 = sphi 0, %s78
      %s80 = sphi 0, %s78
      %s81 = sphi 0, %s80
      %s95 = sphi 0, %s81
      %s99 = sphi 0, %s99
      %s101 = sphi 0, %s99
      %s102 = sphi 0, %s101
      %s116 = sphi 0, %s102
      %s120 = sphi 0, %s120
      %s122 = sphi 0, %s120
      %s123 = sphi 0, %s122
      %s137 = sphi 0, %s123
      %s141 = sphi 0, %s141
      %s143 = sphi 0, %s141
      %s144 = sphi 0, %s143
      %s158 = sphi 0, %s144
      %s162 = sphi 0, %s162
      %s164 = sphi 0, %s162
      %s165 = sphi 0, %s164
      %s179 = sphi 0, %s165
      %s183 = sphi 0, %s183
      %s185 = sphi 0, %s183
      %s186 = sphi 0, %s185
      %s200 = sphi 0, %s186
      %s204 = sphi 0, %s204
      %s206 = sphi 0, %s204
      %s207 = sphi 0, %s206
      %s221 = sphi 0, %s207
      %s225 = sphi 0, %s225
      %s227 = sphi 0, %s225
      %s228 = sphi 0, %s227
      %s242 = sphi 0, %s228
      %s246 = sphi 0, %s246
      %s248 = sphi 0, %s246
      %s249 = sphi 0, %s248
      %s263 = sphi 0, %s249
      %s267 = sphi 0, %s267
      %s269 = sphi 0, %s267
      %s270 = sphi 0, %s269
      %s284 = sphi 0, %s270
      %s288 = sphi 0, %s288
      %s290 = sphi 0, %s288
      %s291 = sphi 0, %s290
      %s305 = sphi 0, %s291
      %s309 = sphi 0, %s309
      %s311 = sphi 0, %s309
      %s312 = sphi 0, %s311
      %s326 = sphi 0, %s312
      %s332 = sphi 0, %s334
      %s335 = sphi 0, %s332
      %s336 = sphi 0, %s335
      %s352 = sphi 0, %s336
    $region4: #{tpu_custom_call.1} parent=1 // loop_header_branch
      %26 = sbr.rel (%p24) target = $region8
    $region5: #{tpu_custom_call.1} parent=1 // loop_body
      %s28 = ssub.s32 %s23, 1
      %s29 = ssub.s32 %s23, 2
      %s30 = sadd.s32 %s23, 1
      %s31 = ssub.s32 %s23, %s30
      %p32 = scmp.eq.s32.totalorder %s31, 0
      %s34 = sadd.s32 %s33, 1
      %s35 = scalar_select %p32, %s33, %s34
      %p38 = pneg %p32
      %p39 = scmp.eq.s32.totalorder %s23, 1
      %p40 = por %p38, %p39
      %p41 = scmp.ne.s32.totalorder %s33, %s36
      %p42 = scmp.eq.s32.totalorder %s23, 0
      %p43 = por %p41, %p42
      %p44 = scmp.ne.s32.totalorder %s33, %s36
      %p45 = scmp.eq.s32.totalorder %s28, 1
      %p46 = por %p44, %p45
      %p47 = scmp.ne.s32.totalorder %s36, %s37
      %p48 = scmp.eq.s32.totalorder %s28, 0
      %p49 = por %p47, %p48
      %p50 = scmp.ne.s32.totalorder %s36, %s37
      %p51 = scmp.eq.s32.totalorder %s29, 1
      %p52 = por %p50, %p51
      %p54 = scmp.ne.s32.totalorder %s37, %s53
      %p55 = scmp.eq.s32.totalorder %s29, 0
      %p56 = por %p54, %p55
      %s58 = sadd.s32 %s57, 1
      %p61 = scmp.eq.s32.totalorder %s23, 1
      %p62 = scmp.ne.s32.totalorder %s57, %s59
      %p63 = scmp.eq.s32.totalorder %s23, 0
      %p64 = por %p62, %p63
      %p65 = scmp.ne.s32.totalorder %s57, %s59
      %p66 = scmp.eq.s32.totalorder %s28, 1
      %p67 = por %p65, %p66
      %p68 = scmp.ne.s32.totalorder %s59, %s60
      %p69 = scmp.eq.s32.totalorder %s28, 0
      %p70 = por %p68, %p69
      %p71 = scmp.ne.s32.totalorder %s59, %s60
      %p72 = scmp.eq.s32.totalorder %s29, 1
      %p73 = por %p71, %p72
      %p75 = scmp.ne.s32.totalorder %s60, %s74
      %p76 = scmp.eq.s32.totalorder %s29, 0
      %p77 = por %p75, %p76
      %s79 = sadd.s32 %s78, 1
      %p82 = scmp.eq.s32.totalorder %s23, 1
      %p83 = scmp.ne.s32.totalorder %s78, %s80
      %p84 = scmp.eq.s32.totalorder %s23, 0
      %p85 = por %p83, %p84
      %p86 = scmp.ne.s32.totalorder %s78, %s80
      %p87 = scmp.eq.s32.totalorder %s28, 1
      %p88 = por %p86, %p87
      %p89 = scmp.ne.s32.totalorder %s80, %s81
      %p90 = scmp.eq.s32.totalorder %s28, 0
      %p91 = por %p89, %p90
      %p92 = scmp.ne.s32.totalorder %s80, %s81
      %p93 = scmp.eq.s32.totalorder %s29, 1
      %p94 = por %p92, %p93
      %p96 = scmp.ne.s32.totalorder %s81, %s95
      %p97 = scmp.eq.s32.totalorder %s29, 0
      %p98 = por %p96, %p97
      %s100 = sadd.s32 %s99, 1
      %p103 = scmp.eq.s32.totalorder %s23, 1
      %p104 = scmp.ne.s32.totalorder %s99, %s101
      %p105 = scmp.eq.s32.totalorder %s23, 0
      %p106 = por %p104, %p105
      %p107 = scmp.ne.s32.totalorder %s99, %s101
      %p108 = scmp.eq.s32.totalorder %s28, 1
      %p109 = por %p107, %p108
      %p110 = scmp.ne.s32.totalorder %s101, %s102
      %p111 = scmp.eq.s32.totalorder %s28, 0
      %p112 = por %p110, %p111
      %p113 = scmp.ne.s32.totalorder %s101, %s102
      %p114 = scmp.eq.s32.totalorder %s29, 1
      %p115 = por %p113, %p114
      %p117 = scmp.ne.s32.totalorder %s102, %s116
      %p118 = scmp.eq.s32.totalorder %s29, 0
      %p119 = por %p117, %p118
      %s121 = sadd.s32 %s120, 1
      %p124 = scmp.eq.s32.totalorder %s23, 1
      %p125 = scmp.ne.s32.totalorder %s120, %s122
      %p126 = scmp.eq.s32.totalorder %s23, 0
      %p127 = por %p125, %p126
      %p128 = scmp.ne.s32.totalorder %s120, %s122
      %p129 = scmp.eq.s32.totalorder %s28, 1
      %p130 = por %p128, %p129
      %p131 = scmp.ne.s32.totalorder %s122, %s123
      %p132 = scmp.eq.s32.totalorder %s28, 0
      %p133 = por %p131, %p132
      %p134 = scmp.ne.s32.totalorder %s122, %s123
      %p135 = scmp.eq.s32.totalorder %s29, 1
      %p136 = por %p134, %p135
      %p138 = scmp.ne.s32.totalorder %s123, %s137
      %p139 = scmp.eq.s32.totalorder %s29, 0
      %p140 = por %p138, %p139
      %s142 = sadd.s32 %s141, 1
      %p145 = scmp.eq.s32.totalorder %s23, 1
      %p146 = scmp.ne.s32.totalorder %s141, %s143
      %p147 = scmp.eq.s32.totalorder %s23, 0
      %p148 = por %p146, %p147
      %p149 = scmp.ne.s32.totalorder %s141, %s143
      %p150 = scmp.eq.s32.totalorder %s28, 1
      %p151 = por %p149, %p150
      %p152 = scmp.ne.s32.totalorder %s143, %s144
      %p153 = scmp.eq.s32.totalorder %s28, 0
      %p154 = por %p152, %p153
      %p155 = scmp.ne.s32.totalorder %s143, %s144
      %p156 = scmp.eq.s32.totalorder %s29, 1
      %p157 = por %p155, %p156
      %p159 = scmp.ne.s32.totalorder %s144, %s158
      %p160 = scmp.eq.s32.totalorder %s29, 0
      %p161 = por %p159, %p160
      %s163 = sadd.s32 %s162, 1
      %p166 = scmp.eq.s32.totalorder %s23, 1
      %p167 = scmp.ne.s32.totalorder %s162, %s164
      %p168 = scmp.eq.s32.totalorder %s23, 0
      %p169 = por %p167, %p168
      %p170 = scmp.ne.s32.totalorder %s162, %s164
      %p171 = scmp.eq.s32.totalorder %s28, 1
      %p172 = por %p170, %p171
      %p173 = scmp.ne.s32.totalorder %s164, %s165
      %p174 = scmp.eq.s32.totalorder %s28, 0
      %p175 = por %p173, %p174
      %p176 = scmp.ne.s32.totalorder %s164, %s165
      %p177 = scmp.eq.s32.totalorder %s29, 1
      %p178 = por %p176, %p177
      %p180 = scmp.ne.s32.totalorder %s165, %s179
      %p181 = scmp.eq.s32.totalorder %s29, 0
      %p182 = por %p180, %p181
      %s184 = sadd.s32 %s183, 1
      %p187 = scmp.eq.s32.totalorder %s23, 1
      %p188 = scmp.ne.s32.totalorder %s183, %s185
      %p189 = scmp.eq.s32.totalorder %s23, 0
      %p190 = por %p188, %p189
      %p191 = scmp.ne.s32.totalorder %s183, %s185
      %p192 = scmp.eq.s32.totalorder %s28, 1
      %p193 = por %p191, %p192
      %p194 = scmp.ne.s32.totalorder %s185, %s186
      %p195 = scmp.eq.s32.totalorder %s28, 0
      %p196 = por %p194, %p195
      %p197 = scmp.ne.s32.totalorder %s185, %s186
      %p198 = scmp.eq.s32.totalorder %s29, 1
      %p199 = por %p197, %p198
      %p201 = scmp.ne.s32.totalorder %s186, %s200
      %p202 = scmp.eq.s32.totalorder %s29, 0
      %p203 = por %p201, %p202
      %s205 = sadd.s32 %s204, 1
      %p208 = scmp.eq.s32.totalorder %s23, 1
      %p209 = scmp.ne.s32.totalorder %s204, %s206
      %p210 = scmp.eq.s32.totalorder %s23, 0
      %p211 = por %p209, %p210
      %p212 = scmp.ne.s32.totalorder %s204, %s206
      %p213 = scmp.eq.s32.totalorder %s28, 1
      %p214 = por %p212, %p213
      %p215 = scmp.ne.s32.totalorder %s206, %s207
      %p216 = scmp.eq.s32.totalorder %s28, 0
      %p217 = por %p215, %p216
      %p218 = scmp.ne.s32.totalorder %s206, %s207
      %p219 = scmp.eq.s32.totalorder %s29, 1
      %p220 = por %p218, %p219
      %p222 = scmp.ne.s32.totalorder %s207, %s221
      %p223 = scmp.eq.s32.totalorder %s29, 0
      %p224 = por %p222, %p223
      %s226 = sadd.s32 %s225, 1
      %p229 = scmp.eq.s32.totalorder %s23, 1
      %p230 = scmp.ne.s32.totalorder %s225, %s227
      %p231 = scmp.eq.s32.totalorder %s23, 0
      %p232 = por %p230, %p231
      %p233 = scmp.ne.s32.totalorder %s225, %s227
      %p234 = scmp.eq.s32.totalorder %s28, 1
      %p235 = por %p233, %p234
      %p236 = scmp.ne.s32.totalorder %s227, %s228
      %p237 = scmp.eq.s32.totalorder %s28, 0
      %p238 = por %p236, %p237
      %p239 = scmp.ne.s32.totalorder %s227, %s228
      %p240 = scmp.eq.s32.totalorder %s29, 1
      %p241 = por %p239, %p240
      %p243 = scmp.ne.s32.totalorder %s228, %s242
      %p244 = scmp.eq.s32.totalorder %s29, 0
      %p245 = por %p243, %p244
      %s247 = sadd.s32 %s246, 1
      %p250 = scmp.eq.s32.totalorder %s23, 1
      %p251 = scmp.ne.s32.totalorder %s246, %s248
      %p252 = scmp.eq.s32.totalorder %s23, 0
      %p253 = por %p251, %p252
      %p254 = scmp.ne.s32.totalorder %s246, %s248
      %p255 = scmp.eq.s32.totalorder %s28, 1
      %p256 = por %p254, %p255
      %p257 = scmp.ne.s32.totalorder %s248, %s249
      %p258 = scmp.eq.s32.totalorder %s28, 0
      %p259 = por %p257, %p258
      %p260 = scmp.ne.s32.totalorder %s248, %s249
      %p261 = scmp.eq.s32.totalorder %s29, 1
      %p262 = por %p260, %p261
      %p264 = scmp.ne.s32.totalorder %s249, %s263
      %p265 = scmp.eq.s32.totalorder %s29, 0
      %p266 = por %p264, %p265
      %s268 = sadd.s32 %s267, 1
      %p271 = scmp.eq.s32.totalorder %s23, 1
      %p272 = scmp.ne.s32.totalorder %s267, %s269
      %p273 = scmp.eq.s32.totalorder %s23, 0
      %p274 = por %p272, %p273
      %p275 = scmp.ne.s32.totalorder %s267, %s269
      %p276 = scmp.eq.s32.totalorder %s28, 1
      %p277 = por %p275, %p276
      %p278 = scmp.ne.s32.totalorder %s269, %s270
      %p279 = scmp.eq.s32.totalorder %s28, 0
      %p280 = por %p278, %p279
      %p281 = scmp.ne.s32.totalorder %s269, %s270
      %p282 = scmp.eq.s32.totalorder %s29, 1
      %p283 = por %p281, %p282
      %p285 = scmp.ne.s32.totalorder %s270, %s284
      %p286 = scmp.eq.s32.totalorder %s29, 0
      %p287 = por %p285, %p286
      %s289 = sadd.s32 %s288, 1
      %p292 = scmp.eq.s32.totalorder %s23, 1
      %p293 = scmp.ne.s32.totalorder %s288, %s290
      %p294 = scmp.eq.s32.totalorder %s23, 0
      %p295 = por %p293, %p294
      %p296 = scmp.ne.s32.totalorder %s288, %s290
      %p297 = scmp.eq.s32.totalorder %s28, 1
      %p298 = por %p296, %p297
      %p299 = scmp.ne.s32.totalorder %s290, %s291
      %p300 = scmp.eq.s32.totalorder %s28, 0
      %p301 = por %p299, %p300
      %p302 = scmp.ne.s32.totalorder %s290, %s291
      %p303 = scmp.eq.s32.totalorder %s29, 1
      %p304 = por %p302, %p303
      %p306 = scmp.ne.s32.totalorder %s291, %s305
      %p307 = scmp.eq.s32.totalorder %s29, 0
      %p308 = por %p306, %p307
      %s310 = sadd.s32 %s309, 1
      %p313 = scmp.eq.s32.totalorder %s23, 1
      %p314 = scmp.ne.s32.totalorder %s309, %s311
      %p315 = scmp.eq.s32.totalorder %s23, 0
      %p316 = por %p314, %p315
      %p317 = scmp.ne.s32.totalorder %s309, %s311
      %p318 = scmp.eq.s32.totalorder %s28, 1
      %p319 = por %p317, %p318
      %p320 = scmp.ne.s32.totalorder %s311, %s312
      %p321 = scmp.eq.s32.totalorder %s28, 0
      %p322 = por %p320, %p321
      %p323 = scmp.ne.s32.totalorder %s311, %s312
      %p324 = scmp.eq.s32.totalorder %s29, 1
      %p325 = por %p323, %p324
      %p327 = scmp.ne.s32.totalorder %s312, %s326
      %p328 = scmp.eq.s32.totalorder %s29, 0
      %p329 = por %p327, %p328
      %s330 = ssub.s32 %s23, %s30
      %p331 = scmp.eq.s32.totalorder %s330, 0
      %s333 = sadd.s32 %s332, 1
      %s334 = scalar_select %p331, %s332, %s333
      %p337 = pneg %p331
      %p338 = scmp.eq.s32.totalorder %s23, 1
      %p339 = por %p337, %p338
      %p340 = scmp.ne.s32.totalorder %s332, %s335
      %p341 = scmp.eq.s32.totalorder %s23, 0
      %p342 = por %p340, %p341
      %p343 = scmp.ne.s32.totalorder %s332, %s335
      %p344 = scmp.eq.s32.totalorder %s28, 1
      %p345 = por %p343, %p344
      %p346 = scmp.ne.s32.totalorder %s335, %s336
      %p347 = scmp.eq.s32.totalorder %s28, 0
      %p348 = por %p346, %p347
      %p349 = scmp.ne.s32.totalorder %s335, %s336
      %p350 = scmp.eq.s32.totalorder %s29, 1
      %p351 = por %p349, %p350
      %p353 = scmp.ne.s32.totalorder %s336, %s352
      %p354 = scmp.eq.s32.totalorder %s29, 0
      %p355 = por %p353, %p354
      %p356 = scmp.le.s32.totalorder 1, %s23
      %p357 = scmp.lt.s32.totalorder %s23, 3
      %p358 = pnand %p356, %p357
      %p359 = pneg %p358
      // Predicated region
      $region9: #{tpu_custom_call.1} parent=5 // pred_check
        _
      $region10: #{tpu_custom_call.1} parent=5 // pred_check_branch
        %361 = sbr.rel (%p358) target = $region12
      $region11: #{tpu_custom_call.1} parent=5 // pred_region
        %s362 = ssub.s32 %s23, 1
        // Predicated region
        $region13: #{tpu_custom_call.1} parent=11 // pred_check
          %p363 = pneg %p70
        $region14: #{tpu_custom_call.1} parent=11 // pred_check_branch
          %365 = sbr.rel (%p363) target = $region16
        $region15: #{tpu_custom_call.1} parent=11 // pred_region
          _
        $region16: #{tpu_custom_call.1} parent=11 // pred_fallthru
          _
        // Predicated region
        $region17: #{tpu_custom_call.1} parent=11 // pred_check
          %p366 = pneg %p91
        $region18: #{tpu_custom_call.1} parent=11 // pred_check_branch
          %368 = sbr.rel (%p366) target = $region20
        $region19: #{tpu_custom_call.1} parent=11 // pred_region
          _
        $region20: #{tpu_custom_call.1} parent=11 // pred_fallthru
          _
        // Predicated region
        $region21: #{tpu_custom_call.1} parent=11 // pred_check
          %p369 = pneg %p112
        $region22: #{tpu_custom_call.1} parent=11 // pred_check_branch
          %371 = sbr.rel (%p369) target = $region24
        $region23: #{tpu_custom_call.1} parent=11 // pred_region
          _
        $region24: #{tpu_custom_call.1} parent=11 // pred_fallthru
          _
        // Predicated region
        $region25: #{tpu_custom_call.1} parent=11 // pred_check
          %p372 = pneg %p133
        $region26: #{tpu_custom_call.1} parent=11 // pred_check_branch
          %374 = sbr.rel (%p372) target = $region28
        $region27: #{tpu_custom_call.1} parent=11 // pred_region
          _
        $region28: #{tpu_custom_call.1} parent=11 // pred_fallthru
          _
        // Predicated region
        $region29: #{tpu_custom_call.1} parent=11 // pred_check
          %p375 = pneg %p154
        $region30: #{tpu_custom_call.1} parent=11 // pred_check_branch
          %377 = sbr.rel (%p375) target = $region32
        $region31: #{tpu_custom_call.1} parent=11 // pred_region
          _
        $region32: #{tpu_custom_call.1} parent=11 // pred_fallthru
          _
        // Predicated region
        $region33: #{tpu_custom_call.1} parent=11 // pred_check
          %p378 = pneg %p175
        $region34: #{tpu_custom_call.1} parent=11 // pred_check_branch
          %380 = sbr.rel (%p378) target = $region36
        $region35: #{tpu_custom_call.1} parent=11 // pred_region
          _
        $region36: #{tpu_custom_call.1} parent=11 // pred_fallthru
          _
        // Predicated region
        $region37: #{tpu_custom_call.1} parent=11 // pred_check
          %p381 = pneg %p196
        $region38: #{tpu_custom_call.1} parent=11 // pred_check_branch
          %383 = sbr.rel (%p381) target = $region40
        $region39: #{tpu_custom_call.1} parent=11 // pred_region
          _
        $region40: #{tpu_custom_call.1} parent=11 // pred_fallthru
          _
        // Predicated region
        $region41: #{tpu_custom_call.1} parent=11 // pred_check
          %p384 = pneg %p217
        $region42: #{tpu_custom_call.1} parent=11 // pred_check_branch
          %386 = sbr.rel (%p384) target = $region44
        $region43: #{tpu_custom_call.1} parent=11 // pred_region
          _
        $region44: #{tpu_custom_call.1} parent=11 // pred_fallthru
          _
        // Predicated region
        $region45: #{tpu_custom_call.1} parent=11 // pred_check
          %p387 = pneg %p238
        $region46: #{tpu_custom_call.1} parent=11 // pred_check_branch
          %389 = sbr.rel (%p387) target = $region48
        $region47: #{tpu_custom_call.1} parent=11 // pred_region
          _
        $region48: #{tpu_custom_call.1} parent=11 // pred_fallthru
          _
        // Predicated region
        $region49: #{tpu_custom_call.1} parent=11 // pred_check
          %p390 = pneg %p259
        $region50: #{tpu_custom_call.1} parent=11 // pred_check_branch
          %392 = sbr.rel (%p390) target = $region52
        $region51: #{tpu_custom_call.1} parent=11 // pred_region
          _
        $region52: #{tpu_custom_call.1} parent=11 // pred_fallthru
          _
        // Predicated region
        $region53: #{tpu_custom_call.1} parent=11 // pred_check
          %p393 = pneg %p280
        $region54: #{tpu_custom_call.1} parent=11 // pred_check_branch
          %395 = sbr.rel (%p393) target = $region56
        $region55: #{tpu_custom_call.1} parent=11 // pred_region
          _
        $region56: #{tpu_custom_call.1} parent=11 // pred_fallthru
          _
        // Predicated region
        $region57: #{tpu_custom_call.1} parent=11 // pred_check
          %p396 = pneg %p301
        $region58: #{tpu_custom_call.1} parent=11 // pred_check_branch
          %398 = sbr.rel (%p396) target = $region60
        $region59: #{tpu_custom_call.1} parent=11 // pred_region
          _
        $region60: #{tpu_custom_call.1} parent=11 // pred_fallthru
          _
        // Predicated region
        $region61: #{tpu_custom_call.1} parent=11 // pred_check
          %p399 = pneg %p322
        $region62: #{tpu_custom_call.1} parent=11 // pred_check_branch
          %401 = sbr.rel (%p399) target = $region64
        $region63: #{tpu_custom_call.1} parent=11 // pred_region
          _
        $region64: #{tpu_custom_call.1} parent=11 // pred_fallthru
          _
      $region12: #{tpu_custom_call.1} parent=5 // pred_fallthru
        _
      %p402 = scmp.lt.s32.totalorder %s23, 2
      // Predicated region
      $region65: #{tpu_custom_call.1} parent=5 // pred_check
        %p403 = pneg %p402
      $region66: #{tpu_custom_call.1} parent=5 // pred_check_branch
        %405 = sbr.rel (%p403) target = $region68
      $region67: #{tpu_custom_call.1} parent=5 // pred_region
        // Predicated region
        $region69: #{tpu_custom_call.1} parent=67 // pred_check
          %p406 = pneg %p43
        $region70: #{tpu_custom_call.1} parent=67 // pred_check_branch
          %408 = sbr.rel (%p406) target = $region72
        $region71: #{tpu_custom_call.1} parent=67 // pred_region
          %p409 = scmp.lt.s32.totalorder %s23, 1
          %s410 = scalar_select %p409, %s23, 1
          %s411 = smul.addr %s410, 8
          %s412 = scalar_lea.vmem %s0, %s411
        $region72: #{tpu_custom_call.1} parent=67 // pred_fallthru
          _
      $region68: #{tpu_custom_call.1} parent=5 // pred_fallthru
        _
      %p413 = scmp.le.s32.totalorder 1, %s23
      %p414 = scmp.lt.s32.totalorder %s23, 3
      %p415 = pnand %p413, %p414
      %p416 = pneg %p415
      // Predicated region
      $region73: #{tpu_custom_call.1} parent=5 // pred_check
        _
      $region74: #{tpu_custom_call.1} parent=5 // pred_check_branch
        %418 = sbr.rel (%p415) target = $region76
      $region75: #{tpu_custom_call.1} parent=5 // pred_region
        %s419 = ssub.s32 %s23, 1
        %p420 = scmp.lt.s32.totalorder %s28, 1
        %s421 = scalar_select %p420, %s28, 1
        %s422 = smul.addr %s421, 8
        %s423 = scalar_lea.vmem %s0, %s422
        %p424 = pneg %p49
        %p425 = pneg %p46
        %p426 = pneg %p70
        %p427 = pneg %p67
        %p428 = pneg %p91
        %p429 = pneg %p88
        %p430 = pneg %p112
        %p431 = pneg %p109
        %p432 = pneg %p133
        %p433 = pneg %p130
        %p434 = pneg %p154
        %p435 = pneg %p151
        %p436 = pneg %p175
        %p437 = pneg %p172
        %p438 = pneg %p196
        %p439 = pneg %p193
        %p440 = pneg %p217
        %p441 = pneg %p214
        %p442 = pneg %p238
        %p443 = pneg %p235
        %p444 = pneg %p259
        %p445 = pneg %p256
        %p446 = pneg %p280
        %p447 = pneg %p277
        %p448 = pneg %p301
        %p449 = pneg %p298
        %p450 = pneg %p322
        %p451 = pneg %p319
        %p452 = pneg %p348
        %p453 = pneg %p345
        %s454 = sand.u32 %s335, 1
        %s455 = scalar_lea.sflag [#allocation3], %s454
        %s456 = sand.u32 %s335, 1
        %s457 = scalar_lea.vmem [#allocation2], %s456
        %p458 = scmp.lt.s32.totalorder %s28, 1
        %s459 = scalar_select %p458, %s28, 1
        %s460 = smul.addr %s459, 8
        %s461 = scalar_lea.vmem %s0, %s460
        %v462 = vld [vmem:[%s461] sm:$0xff]
        %v463 = vlaneseq
        %v464 = vand.u32 %v463, 127
        %465 = vset.pattern.permute.xlu0 0
        %466 = vperm.xlu0 %465, %v462
        %v467 = vpop.permute.xlu0 %466
        %vm468 = vcmp.eq.s32.totalorder %v464, %v467
        %v469 = vsel %vm468, 1, 0
        %v470 = vcvt.s32.f32 %v469
        %v471 = vld [vmem:[%s1] sm:$0xff]
        %v472 = vld [vmem:[%s1 + $0x8] sm:$0xff]
        %v473 = vld [vmem:[%s1 + $0x10] sm:$0xff]
        %v474 = vld [vmem:[%s1 + $0x18] sm:$0xff]
        %v475 = vld [vmem:[%s1 + $0x20] sm:$0xff]
        %v476 = vld [vmem:[%s1 + $0x28] sm:$0xff]
        %v477 = vld [vmem:[%s1 + $0x30] sm:$0x3]
        %vm478 = vcmask 408576
        %v480 = vsel %vm478, %v470, 0
        %vm482 = vcmask 1041408
        %v484 = vsel %vm482, %v477, 0
        %486 = vmatpush.msra.mxu0 0.0
        %487 = vmatpush.msra.mxu0 0.0
        %488 = vmatpush.msra.mxu0 0.0
        %489 = vmatpush.msra.mxu0 0.0
        %490 = vmatpush.msra.mxu0 0.0
        %491 = vmatpush.msra.mxu0 0.0
        %492 = vmatpush.msra.mxu0 0.0
        %493 = vmatpush.msra.mxu0 0.0
        %494 = vmatpush.msra.mxu0 0.0
        %495 = vmatpush.msra.mxu0 %v484
        %496 = vmatpush.msra.mxu0 %v476
        %497 = vmatpush.msra.mxu0 %v475
        %498 = vmatpush.msra.mxu0 %v474
        %499 = vmatpush.msra.mxu0 %v473
        %500 = vmatpush.msra.mxu0 %v472
        %501 = vmatpush.msra.mxu0 %v471
        %502 = vmatmul.f32.gmra.mxu0 %v480
        %v503 = vpop.f32.mrf.mxu0
        %v504 = vadd.f32 0.0, %v503
        %505 = vdwg.mxu0
        %v506 = vld [vmem:[%s2] sm:$0xff]
        %v507 = vld [vmem:[%s2 + $0x8] sm:$0xff]
        %v508 = vld [vmem:[%s2 + $0x10] sm:$0xff]
        %v509 = vld [vmem:[%s2 + $0x18] sm:$0xff]
        %v510 = vld [vmem:[%s2 + $0x20] sm:$0xff]
        %v511 = vld [vmem:[%s2 + $0x28] sm:$0xff]
        %v512 = vld [vmem:[%s2 + $0x30] sm:$0xff]
        %v513 = vld [vmem:[%s2 + $0x38] sm:$0xff]
        %v514 = vld [vmem:[%s3] sm:$0x3]
        %v516 = vperm.slane %v514, 0
        %v517 = vperm.slane %v514, 1
        %vm520 = vcmask 261120
        %v522 = vsel %vm520, %v504, 0
        %524 = vmatpush.msra.mxu0 0.0
        %525 = vmatpush.msra.mxu0 0.0
        %526 = vmatpush.msra.mxu0 0.0
        %527 = vmatpush.msra.mxu0 0.0
        %528 = vmatpush.msra.mxu0 0.0
        %529 = vmatpush.msra.mxu0 0.0
        %530 = vmatpush.msra.mxu0 0.0
        %531 = vmatpush.msra.mxu0 0.0
        %532 = vmatpush.msra.mxu0 0.0
        %533 = vmatpush.msra.mxu0 0.0
        %534 = vmatpush.msra.mxu0 0.0
        %535 = vmatpush.msra.mxu0 0.0
        %536 = vmatpush.msra.mxu0 %v512
        %537 = vmatpush.msra.mxu0 %v510
        %538 = vmatpush.msra.mxu0 %v508
        %539 = vmatpush.msra.mxu0 %v506
        %540 = vmatmul.f32.gmra.mxu0 %v522
        %v541 = vpop.f32.mrf.mxu0
        %v542 = vadd.f32 %v516, %v541
        %543 = vdwg.mxu0
        %544 = vmatpush.msra.mxu0 0.0
        %545 = vmatpush.msra.mxu0 0.0
        %546 = vmatpush.msra.mxu0 0.0
        %547 = vmatpush.msra.mxu0 0.0
        %548 = vmatpush.msra.mxu0 0.0
        %549 = vmatpush.msra.mxu0 0.0
        %550 = vmatpush.msra.mxu0 0.0
        %551 = vmatpush.msra.mxu0 0.0
        %552 = vmatpush.msra.mxu0 0.0
        %553 = vmatpush.msra.mxu0 0.0
        %554 = vmatpush.msra.mxu0 0.0
        %555 = vmatpush.msra.mxu0 0.0
        %556 = vmatpush.msra.mxu0 %v513
        %557 = vmatpush.msra.mxu0 %v511
        %558 = vmatpush.msra.mxu0 %v509
        %559 = vmatpush.msra.mxu0 %v507
        %560 = vmatmul.f32.gmra.mxu0 %v522
        %v561 = vpop.f32.mrf.mxu0
        %v562 = vadd.f32 %v517, %v561
        %563 = vdwg.mxu0
        %v564 = vld [vmem:[%s4] sm:$0xff]
        %v565 = vld [vmem:[%s4 + $0x8] sm:$0xff]
        %v566 = vld [vmem:[%s4 + $0x10] sm:$0xff]
        %v567 = vld [vmem:[%s4 + $0x18] sm:$0xff]
        %v568 = vld [vmem:[%s6] sm:$0xff]
        %v569 = vld [vmem:[%s6 + $0x8] sm:$0xff]
        %v570 = vld [vmem:[%s6 + $0x10] sm:$0xff]
        %v571 = vld [vmem:[%s6 + $0x18] sm:$0xff]
        %v572 = vld [vmem:[%s5] sm:$0x1]
        %v573 = vld [vmem:[%s7] sm:$0x1]
        %v575 = vsel %vm520, 0.0, 0
        %577 = vmatpush.msra.mxu0 0.0
        %578 = vmatpush.msra.mxu0 0.0
        %579 = vmatpush.msra.mxu0 0.0
        %580 = vmatpush.msra.mxu0 0.0
        %581 = vmatpush.msra.mxu0 0.0
        %582 = vmatpush.msra.mxu0 0.0
        %583 = vmatpush.msra.mxu0 0.0
        %584 = vmatpush.msra.mxu0 0.0
        %585 = vmatpush.msra.mxu0 0.0
        %586 = vmatpush.msra.mxu0 0.0
        %587 = vmatpush.msra.mxu0 0.0
        %588 = vmatpush.msra.mxu0 0.0
        %589 = vmatpush.msra.mxu0 %v567
        %590 = vmatpush.msra.mxu0 %v566
        %591 = vmatpush.msra.mxu0 %v565
        %592 = vmatpush.msra.mxu0 %v564
        %593 = vmatmul.f32.gmra.mxu0 %v575
        %v594 = vpop.f32.mrf.mxu0
        %v595 = vadd.f32 %v572, %v594
        %596 = vdwg.mxu0
        %v597 = vadd.f32 %v542, %v595
        %v598 = vxor.u32 %v597, 2147483648
        %v599 = vmul.f32 %v598, 1.442695
        %v600 = vpow.pop %v599
        %v601 = vadd.f32 %v600, 1.0
        %v602 = vrcp.pop %v601
        %v603 = vmul.f32 %v601, %v602
        %v604 = vsub.f32 1.0, %v603
        %v605 = vmul.f32 %v602, %v604
        %v606 = vadd.f32 %v602, %v605
        %vm607 = vweird.f32 %v601
        %vm608 = vweird.f32 %v602
        %vm609 = vmor %vm607, %vm608
        %v610 = vsel %vm609, %v602, %v606
        %v611 = vand.u32 2147483647, %v601
        %vm612 = vcmp.eq.f32.partialorder %v611, 8.507059e+37
        %v613 = vand.u32 %v601, 2147483648
        %v614 = vor.u32 1.1754944e-38, %v613
        %v615 = vsel %vm612, %v614, %v610
        %v616 = vmul.f32 1.0, %v615
        %618 = vrot.lane.b32.xlu0 %v595, 64
        %v619 = vpop.permute.xlu0 %618
        %v621 = vmul.f32 %v616, %v619
        %623 = vrot.lane.b32.xlu0 %v621, 64
        %v624 = vpop.permute.xlu0 %623
        %v626 = vadd.f32 %v542, %v624
        %v627 = vtanh.pop %v626
        %v628 = vsub.f32 1.0, %v616
        %630 = vrot.lane.b32.xlu0 %v627, 96
        %v631 = vpop.permute.xlu0 %630
        %v633 = vmul.f32 %v628, %v631
        %v634 = vmul.f32 %v616, 0.0
        %v635 = vadd.f32 %v633, %v634
        %636 = vmatpush.msra.mxu0 0.0
        %637 = vmatpush.msra.mxu0 0.0
        %638 = vmatpush.msra.mxu0 0.0
        %639 = vmatpush.msra.mxu0 0.0
        %640 = vmatpush.msra.mxu0 0.0
        %641 = vmatpush.msra.mxu0 0.0
        %642 = vmatpush.msra.mxu0 0.0
        %643 = vmatpush.msra.mxu0 0.0
        %644 = vmatpush.msra.mxu0 0.0
        %645 = vmatpush.msra.mxu0 0.0
        %646 = vmatpush.msra.mxu0 0.0
        %647 = vmatpush.msra.mxu0 0.0
        %648 = vmatpush.msra.mxu0 %v571
        %649 = vmatpush.msra.mxu0 %v570
        %650 = vmatpush.msra.mxu0 %v569
        %651 = vmatpush.msra.mxu0 %v568
        %652 = vmatmul.f32.gmra.mxu0 %v575
        %v653 = vpop.f32.mrf.mxu0
        %v654 = vadd.f32 %v573, %v653
        %655 = vdwg.mxu0
        %v657 = vrot.slane %v654, 1
        %658 = vrot.lane.b32.xlu0 %v657, 96
        %v659 = vpop.permute.xlu0 %658
        %v661 = vadd.f32 %v542, %v659
        %v662 = vxor.u32 %v661, 2147483648
        %v663 = vmul.f32 %v662, 1.442695
        %v664 = vpow.pop %v663
        %v665 = vadd.f32 %v664, 1.0
        %v666 = vrcp.pop %v665
        %v667 = vmul.f32 %v665, %v666
        %v668 = vsub.f32 1.0, %v667
        %v669 = vmul.f32 %v666, %v668
        %v670 = vadd.f32 %v666, %v669
        %vm671 = vweird.f32 %v665
        %vm672 = vweird.f32 %v666
        %vm673 = vmor %vm671, %vm672
        %v674 = vsel %vm673, %v666, %v670
        %v675 = vand.u32 2147483647, %v665
        %vm676 = vcmp.eq.f32.partialorder %v675, 8.507059e+37
        %v677 = vand.u32 %v665, 2147483648
        %v678 = vor.u32 1.1754944e-38, %v677
        %v679 = vsel %vm676, %v678, %v674
        %v680 = vmul.f32 1.0, %v679
        %v681 = vadd.f32 %v562, %v659
        %v682 = vxor.u32 %v681, 2147483648
        %v683 = vmul.f32 %v682, 1.442695
        %v684 = vpow.pop %v683
        %v685 = vadd.f32 %v684, 1.0
        %v686 = vrcp.pop %v685
        %v687 = vmul.f32 %v685, %v686
        %v688 = vsub.f32 1.0, %v687
        %v689 = vmul.f32 %v686, %v688
        %v690 = vadd.f32 %v686, %v689
        %vm691 = vweird.f32 %v685
        %vm692 = vweird.f32 %v686
        %vm693 = vmor %vm691, %vm692
        %v694 = vsel %vm693, %v686, %v690
        %v695 = vand.u32 2147483647, %v685
        %vm696 = vcmp.eq.f32.partialorder %v695, 8.507059e+37
        %v697 = vand.u32 %v685, 2147483648
        %v698 = vor.u32 1.1754944e-38, %v697
        %v699 = vsel %vm696, %v698, %v694
        %v700 = vmul.f32 1.0, %v699
        %701 = vrot.lane.b32.xlu0 %v657, 32
        %v702 = vpop.permute.xlu0 %701
        %v704 = vmul.f32 %v680, %v702
        %706 = vrot.lane.b32.xlu0 %v704, 64
        %v707 = vpop.permute.xlu0 %706
        %v709 = vadd.f32 %v562, %v707
        %v710 = vtanh.pop %v709
        %v711 = vsub.f32 1.0, %v700
        %713 = vrot.lane.b32.xlu0 %v710, 96
        %v714 = vpop.permute.xlu0 %713
        %v716 = vmul.f32 %v711, %v714
        %v717 = vmul.f32 %v700, 0.0
        %v718 = vadd.f32 %v716, %v717
        %720 = vrot.lane.b32.xlu0 %v635, 96
        %v721 = vpop.permute.xlu0 %720
        %v722 = vsel %vm520, %v721, 0
        %724 = vmatpush.msra.mxu0 0.0
        %725 = vmatpush.msra.mxu0 0.0
        %726 = vmatpush.msra.mxu0 0.0
        %727 = vmatpush.msra.mxu0 0.0
        %728 = vmatpush.msra.mxu0 0.0
        %729 = vmatpush.msra.mxu0 0.0
        %730 = vmatpush.msra.mxu0 0.0
        %731 = vmatpush.msra.mxu0 0.0
        %732 = vmatpush.msra.mxu0 0.0
        %733 = vmatpush.msra.mxu0 0.0
        %734 = vmatpush.msra.mxu0 0.0
        %735 = vmatpush.msra.mxu0 0.0
        %736 = vmatpush.msra.mxu0 %v567
        %737 = vmatpush.msra.mxu0 %v566
        %738 = vmatpush.msra.mxu0 %v565
        %739 = vmatpush.msra.mxu0 %v564
        %740 = vmatmul.f32.gmra.mxu0 %v722
        %v741 = vpop.f32.mrf.mxu0
        %v742 = vadd.f32 %v572, %v741
        %743 = vdwg.mxu0
        %v745 = vrot.slane %v742, 7
        %v747 = vadd.f32 %v542, %v745
        %v748 = vxor.u32 %v747, 2147483648
        %v749 = vmul.f32 %v748, 1.442695
        %v750 = vpow.pop %v749
        %v751 = vadd.f32 %v750, 1.0
        %v752 = vrcp.pop %v751
        %v753 = vmul.f32 %v751, %v752
        %v754 = vsub.f32 1.0, %v753
        %v755 = vmul.f32 %v752, %v754
        %v756 = vadd.f32 %v752, %v755
        %vm757 = vweird.f32 %v751
        %vm758 = vweird.f32 %v752
        %vm759 = vmor %vm757, %vm758
        %v760 = vsel %vm759, %v752, %v756
        %v761 = vand.u32 2147483647, %v751
        %vm762 = vcmp.eq.f32.partialorder %v761, 8.507059e+37
        %v763 = vand.u32 %v751, 2147483648
        %v764 = vor.u32 1.1754944e-38, %v763
        %v765 = vsel %vm762, %v764, %v760
        %v766 = vmul.f32 1.0, %v765
        %767 = vrot.lane.b32.xlu0 %v745, 64
        %v768 = vpop.permute.xlu0 %767
        %v770 = vmul.f32 %v766, %v768
        %772 = vrot.lane.b32.xlu0 %v770, 64
        %v773 = vpop.permute.xlu0 %772
        %v775 = vadd.f32 %v542, %v773
        %v776 = vtanh.pop %v775
        %v777 = vsub.f32 1.0, %v766
        %779 = vrot.lane.b32.xlu0 %v776, 96
        %v780 = vpop.permute.xlu0 %779
        %v782 = vmul.f32 %v777, %v780
        %v783 = vrot.slane %v635, 7
        %v785 = vmul.f32 %v766, %v783
        %v786 = vadd.f32 %v782, %v785
        %v788 = vrot.slane %v718, 7
        %v789 = vsel %vm520, %v788, 0
        %791 = vmatpush.msra.mxu0 0.0
        %792 = vmatpush.msra.mxu0 0.0
        %793 = vmatpush.msra.mxu0 0.0
        %794 = vmatpush.msra.mxu0 0.0
        %795 = vmatpush.msra.mxu0 0.0
        %796 = vmatpush.msra.mxu0 0.0
        %797 = vmatpush.msra.mxu0 0.0
        %798 = vmatpush.msra.mxu0 0.0
        %799 = vmatpush.msra.mxu0 0.0
        %800 = vmatpush.msra.mxu0 0.0
        %801 = vmatpush.msra.mxu0 0.0
        %802 = vmatpush.msra.mxu0 0.0
        %803 = vmatpush.msra.mxu0 %v571
        %804 = vmatpush.msra.mxu0 %v570
        %805 = vmatpush.msra.mxu0 %v569
        %806 = vmatpush.msra.mxu0 %v568
        %807 = vmatmul.f32.gmra.mxu0 %v789
        %v808 = vpop.f32.mrf.mxu0
        %v809 = vadd.f32 %v573, %v808
        %810 = vdwg.mxu0
        %v812 = vrot.slane %v809, 2
        %813 = vrot.lane.b32.xlu0 %v812, 96
        %v814 = vpop.permute.xlu0 %813
        %v816 = vadd.f32 %v542, %v814
        %v817 = vxor.u32 %v816, 2147483648
        %v818 = vmul.f32 %v817, 1.442695
        %v819 = vpow.pop %v818
        %v820 = vadd.f32 %v819, 1.0
        %v821 = vrcp.pop %v820
        %v822 = vmul.f32 %v820, %v821
        %v823 = vsub.f32 1.0, %v822
        %v824 = vmul.f32 %v821, %v823
        %v825 = vadd.f32 %v821, %v824
        %vm826 = vweird.f32 %v820
        %vm827 = vweird.f32 %v821
        %vm828 = vmor %vm826, %vm827
        %v829 = vsel %vm828, %v821, %v825
        %v830 = vand.u32 2147483647, %v820
        %vm831 = vcmp.eq.f32.partialorder %v830, 8.507059e+37
        %v832 = vand.u32 %v820, 2147483648
        %v833 = vor.u32 1.1754944e-38, %v832
        %v834 = vsel %vm831, %v833, %v829
        %v835 = vmul.f32 1.0, %v834
        %v836 = vadd.f32 %v562, %v814
        %v837 = vxor.u32 %v836, 2147483648
        %v838 = vmul.f32 %v837, 1.442695
        %v839 = vpow.pop %v838
        %v840 = vadd.f32 %v839, 1.0
        %v841 = vrcp.pop %v840
        %v842 = vmul.f32 %v840, %v841
        %v843 = vsub.f32 1.0, %v842
        %v844 = vmul.f32 %v841, %v843
        %v845 = vadd.f32 %v841, %v844
        %vm846 = vweird.f32 %v840
        %vm847 = vweird.f32 %v841
        %vm848 = vmor %vm846, %vm847
        %v849 = vsel %vm848, %v841, %v845
        %v850 = vand.u32 2147483647, %v840
        %vm851 = vcmp.eq.f32.partialorder %v850, 8.507059e+37
        %v852 = vand.u32 %v840, 2147483648
        %v853 = vor.u32 1.1754944e-38, %v852
        %v854 = vsel %vm851, %v853, %v849
        %v855 = vmul.f32 1.0, %v854
        %856 = vrot.lane.b32.xlu0 %v812, 32
        %v857 = vpop.permute.xlu0 %856
        %v859 = vmul.f32 %v835, %v857
        %861 = vrot.lane.b32.xlu0 %v859, 64
        %v862 = vpop.permute.xlu0 %861
        %v864 = vadd.f32 %v562, %v862
        %v865 = vtanh.pop %v864
        %v866 = vsub.f32 1.0, %v855
        %868 = vrot.lane.b32.xlu0 %v865, 96
        %v869 = vpop.permute.xlu0 %868
        %v871 = vmul.f32 %v866, %v869
        %v872 = vrot.slane %v718, 1
        %v874 = vmul.f32 %v855, %v872
        %v875 = vadd.f32 %v871, %v874
        %v877 = vrot.slane %v786, 1
        %878 = vrot.lane.b32.xlu0 %v877, 96
        %v879 = vpop.permute.xlu0 %878
        %v880 = vsel %vm520, %v879, 0
        %882 = vmatpush.msra.mxu0 0.0
        %883 = vmatpush.msra.mxu0 0.0
        %884 = vmatpush.msra.mxu0 0.0
        %885 = vmatpush.msra.mxu0 0.0
        %886 = vmatpush.msra.mxu0 0.0
        %887 = vmatpush.msra.mxu0 0.0
        %888 = vmatpush.msra.mxu0 0.0
        %889 = vmatpush.msra.mxu0 0.0
        %890 = vmatpush.msra.mxu0 0.0
        %891 = vmatpush.msra.mxu0 0.0
        %892 = vmatpush.msra.mxu0 0.0
        %893 = vmatpush.msra.mxu0 0.0
        %894 = vmatpush.msra.mxu0 %v567
        %895 = vmatpush.msra.mxu0 %v566
        %896 = vmatpush.msra.mxu0 %v565
        %897 = vmatpush.msra.mxu0 %v564
        %898 = vmatmul.f32.gmra.mxu0 %v880
        %v899 = vpop.f32.mrf.mxu0
        %v900 = vadd.f32 %v572, %v899
        %901 = vdwg.mxu0
        %v903 = vrot.slane %v900, 6
        %v905 = vadd.f32 %v542, %v903
        %v906 = vxor.u32 %v905, 2147483648
        %v907 = vmul.f32 %v906, 1.442695
        %v908 = vpow.pop %v907
        %v909 = vadd.f32 %v908, 1.0
        %v910 = vrcp.pop %v909
        %v911 = vmul.f32 %v909, %v910
        %v912 = vsub.f32 1.0, %v911
        %v913 = vmul.f32 %v910, %v912
        %v914 = vadd.f32 %v910, %v913
        %vm915 = vweird.f32 %v909
        %vm916 = vweird.f32 %v910
        %vm917 = vmor %vm915, %vm916
        %v918 = vsel %vm917, %v910, %v914
        %v919 = vand.u32 2147483647, %v909
        %vm920 = vcmp.eq.f32.partialorder %v919, 8.507059e+37
        %v921 = vand.u32 %v909, 2147483648
        %v922 = vor.u32 1.1754944e-38, %v921
        %v923 = vsel %vm920, %v922, %v918
        %v924 = vmul.f32 1.0, %v923
        %925 = vrot.lane.b32.xlu0 %v903, 64
        %v926 = vpop.permute.xlu0 %925
        %v928 = vmul.f32 %v924, %v926
        %930 = vrot.lane.b32.xlu0 %v928, 64
        %v931 = vpop.permute.xlu0 %930
        %v933 = vadd.f32 %v542, %v931
        %v934 = vtanh.pop %v933
        %v935 = vsub.f32 1.0, %v924
        %937 = vrot.lane.b32.xlu0 %v934, 96
        %v938 = vpop.permute.xlu0 %937
        %v940 = vmul.f32 %v935, %v938
        %v941 = vrot.slane %v786, 7
        %v943 = vmul.f32 %v924, %v941
        %v944 = vadd.f32 %v940, %v943
        %v946 = vrot.slane %v875, 6
        %v947 = vsel %vm520, %v946, 0
        %949 = vmatpush.msra.mxu0 0.0
        %950 = vmatpush.msra.mxu0 0.0
        %951 = vmatpush.msra.mxu0 0.0
        %952 = vmatpush.msra.mxu0 0.0
        %953 = vmatpush.msra.mxu0 0.0
        %954 = vmatpush.msra.mxu0 0.0
        %955 = vmatpush.msra.mxu0 0.0
        %956 = vmatpush.msra.mxu0 0.0
        %957 = vmatpush.msra.mxu0 0.0
        %958 = vmatpush.msra.mxu0 0.0
        %959 = vmatpush.msra.mxu0 0.0
        %960 = vmatpush.msra.mxu0 0.0
        %961 = vmatpush.msra.mxu0 %v571
        %962 = vmatpush.msra.mxu0 %v570
        %963 = vmatpush.msra.mxu0 %v569
        %964 = vmatpush.msra.mxu0 %v568
        %965 = vmatmul.f32.gmra.mxu0 %v947
        %v966 = vpop.f32.mrf.mxu0
        %v967 = vadd.f32 %v573, %v966
        %968 = vdwg.mxu0
        %v970 = vrot.slane %v967, 3
        %971 = vrot.lane.b32.xlu0 %v970, 96
        %v972 = vpop.permute.xlu0 %971
        %v974 = vadd.f32 %v542, %v972
        %v975 = vxor.u32 %v974, 2147483648
        %v976 = vmul.f32 %v975, 1.442695
        %v977 = vpow.pop %v976
        %v978 = vadd.f32 %v977, 1.0
        %v979 = vrcp.pop %v978
        %v980 = vmul.f32 %v978, %v979
        %v981 = vsub.f32 1.0, %v980
        %v982 = vmul.f32 %v979, %v981
        %v983 = vadd.f32 %v979, %v982
        %vm984 = vweird.f32 %v978
        %vm985 = vweird.f32 %v979
        %vm986 = vmor %vm984, %vm985
        %v987 = vsel %vm986, %v979, %v983
        %v988 = vand.u32 2147483647, %v978
        %vm989 = vcmp.eq.f32.partialorder %v988, 8.507059e+37
        %v990 = vand.u32 %v978, 2147483648
        %v991 = vor.u32 1.1754944e-38, %v990
        %v992 = vsel %vm989, %v991, %v987
        %v993 = vmul.f32 1.0, %v992
        %v994 = vadd.f32 %v562, %v972
        %v995 = vxor.u32 %v994, 2147483648
        %v996 = vmul.f32 %v995, 1.442695
        %v997 = vpow.pop %v996
        %v998 = vadd.f32 %v997, 1.0
        %v999 = vrcp.pop %v998
        %v1000 = vmul.f32 %v998, %v999
        %v1001 = vsub.f32 1.0, %v1000
        %v1002 = vmul.f32 %v999, %v1001
        %v1003 = vadd.f32 %v999, %v1002
        %vm1004 = vweird.f32 %v998
        %vm1005 = vweird.f32 %v999
        %vm1006 = vmor %vm1004, %vm1005
        %v1007 = vsel %vm1006, %v999, %v1003
        %v1008 = vand.u32 2147483647, %v998
        %vm1009 = vcmp.eq.f32.partialorder %v1008, 8.507059e+37
        %v1010 = vand.u32 %v998, 2147483648
        %v1011 = vor.u32 1.1754944e-38, %v1010
        %v1012 = vsel %vm1009, %v1011, %v1007
        %v1013 = vmul.f32 1.0, %v1012
        %1014 = vrot.lane.b32.xlu0 %v970, 32
        %v1015 = vpop.permute.xlu0 %1014
        %v1017 = vmul.f32 %v993, %v1015
        %1019 = vrot.lane.b32.xlu0 %v1017, 64
        %v1020 = vpop.permute.xlu0 %1019
        %v1022 = vadd.f32 %v562, %v1020
        %v1023 = vtanh.pop %v1022
        %v1024 = vsub.f32 1.0, %v1013
        %1026 = vrot.lane.b32.xlu0 %v1023, 96
        %v1027 = vpop.permute.xlu0 %1026
        %v1029 = vmul.f32 %v1024, %v1027
        %v1030 = vrot.slane %v875, 1
        %v1032 = vmul.f32 %v1013, %v1030
        %v1033 = vadd.f32 %v1029, %v1032
        %v1035 = vrot.slane %v944, 2
        %1036 = vrot.lane.b32.xlu0 %v1035, 96
        %v1037 = vpop.permute.xlu0 %1036
        %v1038 = vsel %vm520, %v1037, 0
        %1040 = vmatpush.msra.mxu0 0.0
        %1041 = vmatpush.msra.mxu0 0.0
        %1042 = vmatpush.msra.mxu0 0.0
        %1043 = vmatpush.msra.mxu0 0.0
        %1044 = vmatpush.msra.mxu0 0.0
        %1045 = vmatpush.msra.mxu0 0.0
        %1046 = vmatpush.msra.mxu0 0.0
        %1047 = vmatpush.msra.mxu0 0.0
        %1048 = vmatpush.msra.mxu0 0.0
        %1049 = vmatpush.msra.mxu0 0.0
        %1050 = vmatpush.msra.mxu0 0.0
        %1051 = vmatpush.msra.mxu0 0.0
        %1052 = vmatpush.msra.mxu0 %v567
        %1053 = vmatpush.msra.mxu0 %v566
        %1054 = vmatpush.msra.mxu0 %v565
        %1055 = vmatpush.msra.mxu0 %v564
        %1056 = vmatmul.f32.gmra.mxu0 %v1038
        %v1057 = vpop.f32.mrf.mxu0
        %v1058 = vadd.f32 %v572, %v1057
        %1059 = vdwg.mxu0
        %v1061 = vrot.slane %v1058, 5
        %v1063 = vadd.f32 %v542, %v1061
        %v1064 = vxor.u32 %v1063, 2147483648
        %v1065 = vmul.f32 %v1064, 1.442695
        %v1066 = vpow.pop %v1065
        %v1067 = vadd.f32 %v1066, 1.0
        %v1068 = vrcp.pop %v1067
        %v1069 = vmul.f32 %v1067, %v1068
        %v1070 = vsub.f32 1.0, %v1069
        %v1071 = vmul.f32 %v1068, %v1070
        %v1072 = vadd.f32 %v1068, %v1071
        %vm1073 = vweird.f32 %v1067
        %vm1074 = vweird.f32 %v1068
        %vm1075 = vmor %vm1073, %vm1074
        %v1076 = vsel %vm1075, %v1068, %v1072
        %v1077 = vand.u32 2147483647, %v1067
        %vm1078 = vcmp.eq.f32.partialorder %v1077, 8.507059e+37
        %v1079 = vand.u32 %v1067, 2147483648
        %v1080 = vor.u32 1.1754944e-38, %v1079
        %v1081 = vsel %vm1078, %v1080, %v1076
        %v1082 = vmul.f32 1.0, %v1081
        %1083 = vrot.lane.b32.xlu0 %v1061, 64
        %v1084 = vpop.permute.xlu0 %1083
        %v1086 = vmul.f32 %v1082, %v1084
        %1088 = vrot.lane.b32.xlu0 %v1086, 64
        %v1089 = vpop.permute.xlu0 %1088
        %v1091 = vadd.f32 %v542, %v1089
        %v1092 = vtanh.pop %v1091
        %v1093 = vsub.f32 1.0, %v1082
        %1095 = vrot.lane.b32.xlu0 %v1092, 96
        %v1096 = vpop.permute.xlu0 %1095
        %v1098 = vmul.f32 %v1093, %v1096
        %v1099 = vrot.slane %v944, 7
        %v1101 = vmul.f32 %v1082, %v1099
        %v1102 = vadd.f32 %v1098, %v1101
        %v1104 = vrot.slane %v1033, 5
        %v1105 = vsel %vm520, %v1104, 0
        %1107 = vmatpush.msra.mxu0 0.0
        %1108 = vmatpush.msra.mxu0 0.0
        %1109 = vmatpush.msra.mxu0 0.0
        %1110 = vmatpush.msra.mxu0 0.0
        %1111 = vmatpush.msra.mxu0 0.0
        %1112 = vmatpush.msra.mxu0 0.0
        %1113 = vmatpush.msra.mxu0 0.0
        %1114 = vmatpush.msra.mxu0 0.0
        %1115 = vmatpush.msra.mxu0 0.0
        %1116 = vmatpush.msra.mxu0 0.0
        %1117 = vmatpush.msra.mxu0 0.0
        %1118 = vmatpush.msra.mxu0 0.0
        %1119 = vmatpush.msra.mxu0 %v571
        %1120 = vmatpush.msra.mxu0 %v570
        %1121 = vmatpush.msra.mxu0 %v569
        %1122 = vmatpush.msra.mxu0 %v568
        %1123 = vmatmul.f32.gmra.mxu0 %v1105
        %v1124 = vpop.f32.mrf.mxu0
        %v1125 = vadd.f32 %v573, %v1124
        %1126 = vdwg.mxu0
        %v1128 = vrot.slane %v1125, 4
        %1129 = vrot.lane.b32.xlu0 %v1128, 96
        %v1130 = vpop.permute.xlu0 %1129
        %v1132 = vadd.f32 %v542, %v1130
        %v1133 = vxor.u32 %v1132, 2147483648
        %v1134 = vmul.f32 %v1133, 1.442695
        %v1135 = vpow.pop %v1134
        %v1136 = vadd.f32 %v1135, 1.0
        %v1137 = vrcp.pop %v1136
        %v1138 = vmul.f32 %v1136, %v1137
        %v1139 = vsub.f32 1.0, %v1138
        %v1140 = vmul.f32 %v1137, %v1139
        %v1141 = vadd.f32 %v1137, %v1140
        %vm1142 = vweird.f32 %v1136
        %vm1143 = vweird.f32 %v1137
        %vm1144 = vmor %vm1142, %vm1143
        %v1145 = vsel %vm1144, %v1137, %v1141
        %v1146 = vand.u32 2147483647, %v1136
        %vm1147 = vcmp.eq.f32.partialorder %v1146, 8.507059e+37
        %v1148 = vand.u32 %v1136, 2147483648
        %v1149 = vor.u32 1.1754944e-38, %v1148
        %v1150 = vsel %vm1147, %v1149, %v1145
        %v1151 = vmul.f32 1.0, %v1150
        %v1152 = vadd.f32 %v562, %v1130
        %v1153 = vxor.u32 %v1152, 2147483648
        %v1154 = vmul.f32 %v1153, 1.442695
        %v1155 = vpow.pop %v1154
        %v1156 = vadd.f32 %v1155, 1.0
        %v1157 = vrcp.pop %v1156
        %v1158 = vmul.f32 %v1156, %v1157
        %v1159 = vsub.f32 1.0, %v1158
        %v1160 = vmul.f32 %v1157, %v1159
        %v1161 = vadd.f32 %v1157, %v1160
        %vm1162 = vweird.f32 %v1156
        %vm1163 = vweird.f32 %v1157
        %vm1164 = vmor %vm1162, %vm1163
        %v1165 = vsel %vm1164, %v1157, %v1161
        %v1166 = vand.u32 2147483647, %v1156
        %vm1167 = vcmp.eq.f32.partialorder %v1166, 8.507059e+37
        %v1168 = vand.u32 %v1156, 2147483648
        %v1169 = vor.u32 1.1754944e-38, %v1168
        %v1170 = vsel %vm1167, %v1169, %v1165
        %v1171 = vmul.f32 1.0, %v1170
        %1172 = vrot.lane.b32.xlu0 %v1128, 32
        %v1173 = vpop.permute.xlu0 %1172
        %v1175 = vmul.f32 %v1151, %v1173
        %1177 = vrot.lane.b32.xlu0 %v1175, 64
        %v1178 = vpop.permute.xlu0 %1177
        %v1180 = vadd.f32 %v562, %v1178
        %v1181 = vtanh.pop %v1180
        %v1182 = vsub.f32 1.0, %v1171
        %1184 = vrot.lane.b32.xlu0 %v1181, 96
        %v1185 = vpop.permute.xlu0 %1184
        %v1187 = vmul.f32 %v1182, %v1185
        %v1188 = vrot.slane %v1033, 1
        %v1190 = vmul.f32 %v1171, %v1188
        %v1191 = vadd.f32 %v1187, %v1190
        %v1193 = vrot.slane %v1102, 3
        %1194 = vrot.lane.b32.xlu0 %v1193, 96
        %v1195 = vpop.permute.xlu0 %1194
        %v1196 = vsel %vm520, %v1195, 0
        %1198 = vmatpush.msra.mxu0 0.0
        %1199 = vmatpush.msra.mxu0 0.0
        %1200 = vmatpush.msra.mxu0 0.0
        %1201 = vmatpush.msra.mxu0 0.0
        %1202 = vmatpush.msra.mxu0 0.0
        %1203 = vmatpush.msra.mxu0 0.0
        %1204 = vmatpush.msra.mxu0 0.0
        %1205 = vmatpush.msra.mxu0 0.0
        %1206 = vmatpush.msra.mxu0 0.0
        %1207 = vmatpush.msra.mxu0 0.0
        %1208 = vmatpush.msra.mxu0 0.0
        %1209 = vmatpush.msra.mxu0 0.0
        %1210 = vmatpush.msra.mxu0 %v567
        %1211 = vmatpush.msra.mxu0 %v566
        %1212 = vmatpush.msra.mxu0 %v565
        %1213 = vmatpush.msra.mxu0 %v564
        %1214 = vmatmul.f32.gmra.mxu0 %v1196
        %v1215 = vpop.f32.mrf.mxu0
        %v1216 = vadd.f32 %v572, %v1215
        %1217 = vdwg.mxu0
        %v1219 = vrot.slane %v1216, 4
        %v1221 = vadd.f32 %v542, %v1219
        %v1222 = vxor.u32 %v1221, 2147483648
        %v1223 = vmul.f32 %v1222, 1.442695
        %v1224 = vpow.pop %v1223
        %v1225 = vadd.f32 %v1224, 1.0
        %v1226 = vrcp.pop %v1225
        %v1227 = vmul.f32 %v1225, %v1226
        %v1228 = vsub.f32 1.0, %v1227
        %v1229 = vmul.f32 %v1226, %v1228
        %v1230 = vadd.f32 %v1226, %v1229
        %vm1231 = vweird.f32 %v1225
        %vm1232 = vweird.f32 %v1226
        %vm1233 = vmor %vm1231, %vm1232
        %v1234 = vsel %vm1233, %v1226, %v1230
        %v1235 = vand.u32 2147483647, %v1225
        %vm1236 = vcmp.eq.f32.partialorder %v1235, 8.507059e+37
        %v1237 = vand.u32 %v1225, 2147483648
        %v1238 = vor.u32 1.1754944e-38, %v1237
        %v1239 = vsel %vm1236, %v1238, %v1234
        %v1240 = vmul.f32 1.0, %v1239
        %1241 = vrot.lane.b32.xlu0 %v1219, 64
        %v1242 = vpop.permute.xlu0 %1241
        %v1244 = vmul.f32 %v1240, %v1242
        %1246 = vrot.lane.b32.xlu0 %v1244, 64
        %v1247 = vpop.permute.xlu0 %1246
        %v1249 = vadd.f32 %v542, %v1247
        %v1250 = vtanh.pop %v1249
        %v1251 = vsub.f32 1.0, %v1240
        %1253 = vrot.lane.b32.xlu0 %v1250, 96
        %v1254 = vpop.permute.xlu0 %1253
        %v1256 = vmul.f32 %v1251, %v1254
        %v1257 = vrot.slane %v1102, 7
        %v1259 = vmul.f32 %v1240, %v1257
        %v1260 = vadd.f32 %v1256, %v1259
        %v1262 = vrot.slane %v1191, 4
        %v1263 = vsel %vm520, %v1262, 0
        %1265 = vmatpush.msra.mxu0 0.0
        %1266 = vmatpush.msra.mxu0 0.0
        %1267 = vmatpush.msra.mxu0 0.0
        %1268 = vmatpush.msra.mxu0 0.0
        %1269 = vmatpush.msra.mxu0 0.0
        %1270 = vmatpush.msra.mxu0 0.0
        %1271 = vmatpush.msra.mxu0 0.0
        %1272 = vmatpush.msra.mxu0 0.0
        %1273 = vmatpush.msra.mxu0 0.0
        %1274 = vmatpush.msra.mxu0 0.0
        %1275 = vmatpush.msra.mxu0 0.0
        %1276 = vmatpush.msra.mxu0 0.0
        %1277 = vmatpush.msra.mxu0 %v571
        %1278 = vmatpush.msra.mxu0 %v570
        %1279 = vmatpush.msra.mxu0 %v569
        %1280 = vmatpush.msra.mxu0 %v568
        %1281 = vmatmul.f32.gmra.mxu0 %v1263
        %v1282 = vpop.f32.mrf.mxu0
        %v1283 = vadd.f32 %v573, %v1282
        %1284 = vdwg.mxu0
        %v1286 = vrot.slane %v1283, 5
        %1287 = vrot.lane.b32.xlu0 %v1286, 96
        %v1288 = vpop.permute.xlu0 %1287
        %v1290 = vadd.f32 %v542, %v1288
        %v1291 = vxor.u32 %v1290, 2147483648
        %v1292 = vmul.f32 %v1291, 1.442695
        %v1293 = vpow.pop %v1292
        %v1294 = vadd.f32 %v1293, 1.0
        %v1295 = vrcp.pop %v1294
        %v1296 = vmul.f32 %v1294, %v1295
        %v1297 = vsub.f32 1.0, %v1296
        %v1298 = vmul.f32 %v1295, %v1297
        %v1299 = vadd.f32 %v1295, %v1298
        %vm1300 = vweird.f32 %v1294
        %vm1301 = vweird.f32 %v1295
        %vm1302 = vmor %vm1300, %vm1301
        %v1303 = vsel %vm1302, %v1295, %v1299
        %v1304 = vand.u32 2147483647, %v1294
        %vm1305 = vcmp.eq.f32.partialorder %v1304, 8.507059e+37
        %v1306 = vand.u32 %v1294, 2147483648
        %v1307 = vor.u32 1.1754944e-38, %v1306
        %v1308 = vsel %vm1305, %v1307, %v1303
        %v1309 = vmul.f32 1.0, %v1308
        %v1310 = vadd.f32 %v562, %v1288
        %v1311 = vxor.u32 %v1310, 2147483648
        %v1312 = vmul.f32 %v1311, 1.442695
        %v1313 = vpow.pop %v1312
        %v1314 = vadd.f32 %v1313, 1.0
        %v1315 = vrcp.pop %v1314
        %v1316 = vmul.f32 %v1314, %v1315
        %v1317 = vsub.f32 1.0, %v1316
        %v1318 = vmul.f32 %v1315, %v1317
        %v1319 = vadd.f32 %v1315, %v1318
        %vm1320 = vweird.f32 %v1314
        %vm1321 = vweird.f32 %v1315
        %vm1322 = vmor %vm1320, %vm1321
        %v1323 = vsel %vm1322, %v1315, %v1319
        %v1324 = vand.u32 2147483647, %v1314
        %vm1325 = vcmp.eq.f32.partialorder %v1324, 8.507059e+37
        %v1326 = vand.u32 %v1314, 2147483648
        %v1327 = vor.u32 1.1754944e-38, %v1326
        %v1328 = vsel %vm1325, %v1327, %v1323
        %v1329 = vmul.f32 1.0, %v1328
        %1330 = vrot.lane.b32.xlu0 %v1286, 32
        %v1331 = vpop.permute.xlu0 %1330
        %v1333 = vmul.f32 %v1309, %v1331
        %1335 = vrot.lane.b32.xlu0 %v1333, 64
        %v1336 = vpop.permute.xlu0 %1335
        %v1338 = vadd.f32 %v562, %v1336
        %v1339 = vtanh.pop %v1338
        %v1340 = vsub.f32 1.0, %v1329
        %1342 = vrot.lane.b32.xlu0 %v1339, 96
        %v1343 = vpop.permute.xlu0 %1342
        %v1345 = vmul.f32 %v1340, %v1343
        %v1346 = vrot.slane %v1191, 1
        %v1348 = vmul.f32 %v1329, %v1346
        %v1349 = vadd.f32 %v1345, %v1348
        %v1351 = vrot.slane %v1260, 4
        %1352 = vrot.lane.b32.xlu0 %v1351, 96
        %v1353 = vpop.permute.xlu0 %1352
        %v1354 = vsel %vm520, %v1353, 0
        %1356 = vmatpush.msra.mxu0 0.0
        %1357 = vmatpush.msra.mxu0 0.0
        %1358 = vmatpush.msra.mxu0 0.0
        %1359 = vmatpush.msra.mxu0 0.0
        %1360 = vmatpush.msra.mxu0 0.0
        %1361 = vmatpush.msra.mxu0 0.0
        %1362 = vmatpush.msra.mxu0 0.0
        %1363 = vmatpush.msra.mxu0 0.0
        %1364 = vmatpush.msra.mxu0 0.0
        %1365 = vmatpush.msra.mxu0 0.0
        %1366 = vmatpush.msra.mxu0 0.0
        %1367 = vmatpush.msra.mxu0 0.0
        %1368 = vmatpush.msra.mxu0 %v567
        %1369 = vmatpush.msra.mxu0 %v566
        %1370 = vmatpush.msra.mxu0 %v565
        %1371 = vmatpush.msra.mxu0 %v564
        %1372 = vmatmul.f32.gmra.mxu0 %v1354
        %v1373 = vpop.f32.mrf.mxu0
        %v1374 = vadd.f32 %v572, %v1373
        %1375 = vdwg.mxu0
        %v1377 = vrot.slane %v1374, 3
        %v1379 = vadd.f32 %v542, %v1377
        %v1380 = vxor.u32 %v1379, 2147483648
        %v1381 = vmul.f32 %v1380, 1.442695
        %v1382 = vpow.pop %v1381
        %v1383 = vadd.f32 %v1382, 1.0
        %v1384 = vrcp.pop %v1383
        %v1385 = vmul.f32 %v1383, %v1384
        %v1386 = vsub.f32 1.0, %v1385
        %v1387 = vmul.f32 %v1384, %v1386
        %v1388 = vadd.f32 %v1384, %v1387
        %vm1389 = vweird.f32 %v1383
        %vm1390 = vweird.f32 %v1384
        %vm1391 = vmor %vm1389, %vm1390
        %v1392 = vsel %vm1391, %v1384, %v1388
        %v1393 = vand.u32 2147483647, %v1383
        %vm1394 = vcmp.eq.f32.partialorder %v1393, 8.507059e+37
        %v1395 = vand.u32 %v1383, 2147483648
        %v1396 = vor.u32 1.1754944e-38, %v1395
        %v1397 = vsel %vm1394, %v1396, %v1392
        %v1398 = vmul.f32 1.0, %v1397
        %1399 = vrot.lane.b32.xlu0 %v1377, 64
        %v1400 = vpop.permute.xlu0 %1399
        %v1402 = vmul.f32 %v1398, %v1400
        %1404 = vrot.lane.b32.xlu0 %v1402, 64
        %v1405 = vpop.permute.xlu0 %1404
        %v1407 = vadd.f32 %v542, %v1405
        %v1408 = vtanh.pop %v1407
        %v1409 = vsub.f32 1.0, %v1398
        %1411 = vrot.lane.b32.xlu0 %v1408, 96
        %v1412 = vpop.permute.xlu0 %1411
        %v1414 = vmul.f32 %v1409, %v1412
        %v1415 = vrot.slane %v1260, 7
        %v1417 = vmul.f32 %v1398, %v1415
        %v1418 = vadd.f32 %v1414, %v1417
        %v1420 = vrot.slane %v1349, 3
        %v1421 = vsel %vm520, %v1420, 0
        %1423 = vmatpush.msra.mxu0 0.0
        %1424 = vmatpush.msra.mxu0 0.0
        %1425 = vmatpush.msra.mxu0 0.0
        %1426 = vmatpush.msra.mxu0 0.0
        %1427 = vmatpush.msra.mxu0 0.0
        %1428 = vmatpush.msra.mxu0 0.0
        %1429 = vmatpush.msra.mxu0 0.0
        %1430 = vmatpush.msra.mxu0 0.0
        %1431 = vmatpush.msra.mxu0 0.0
        %1432 = vmatpush.msra.mxu0 0.0
        %1433 = vmatpush.msra.mxu0 0.0
        %1434 = vmatpush.msra.mxu0 0.0
        %1435 = vmatpush.msra.mxu0 %v571
        %1436 = vmatpush.msra.mxu0 %v570
        %1437 = vmatpush.msra.mxu0 %v569
        %1438 = vmatpush.msra.mxu0 %v568
        %1439 = vmatmul.f32.gmra.mxu0 %v1421
        %v1440 = vpop.f32.mrf.mxu0
        %v1441 = vadd.f32 %v573, %v1440
        %1442 = vdwg.mxu0
        %v1444 = vrot.slane %v1441, 6
        %1445 = vrot.lane.b32.xlu0 %v1444, 96
        %v1446 = vpop.permute.xlu0 %1445
        %v1448 = vadd.f32 %v542, %v1446
        %v1449 = vxor.u32 %v1448, 2147483648
        %v1450 = vmul.f32 %v1449, 1.442695
        %v1451 = vpow.pop %v1450
        %v1452 = vadd.f32 %v1451, 1.0
        %v1453 = vrcp.pop %v1452
        %v1454 = vmul.f32 %v1452, %v1453
        %v1455 = vsub.f32 1.0, %v1454
        %v1456 = vmul.f32 %v1453, %v1455
        %v1457 = vadd.f32 %v1453, %v1456
        %vm1458 = vweird.f32 %v1452
        %vm1459 = vweird.f32 %v1453
        %vm1460 = vmor %vm1458, %vm1459
        %v1461 = vsel %vm1460, %v1453, %v1457
        %v1462 = vand.u32 2147483647, %v1452
        %vm1463 = vcmp.eq.f32.partialorder %v1462, 8.507059e+37
        %v1464 = vand.u32 %v1452, 2147483648
        %v1465 = vor.u32 1.1754944e-38, %v1464
        %v1466 = vsel %vm1463, %v1465, %v1461
        %v1467 = vmul.f32 1.0, %v1466
        %v1468 = vadd.f32 %v562, %v1446
        %v1469 = vxor.u32 %v1468, 2147483648
        %v1470 = vmul.f32 %v1469, 1.442695
        %v1471 = vpow.pop %v1470
        %v1472 = vadd.f32 %v1471, 1.0
        %v1473 = vrcp.pop %v1472
        %v1474 = vmul.f32 %v1472, %v1473
        %v1475 = vsub.f32 1.0, %v1474
        %v1476 = vmul.f32 %v1473, %v1475
        %v1477 = vadd.f32 %v1473, %v1476
        %vm1478 = vweird.f32 %v1472
        %vm1479 = vweird.f32 %v1473
        %vm1480 = vmor %vm1478, %vm1479
        %v1481 = vsel %vm1480, %v1473, %v1477
        %v1482 = vand.u32 2147483647, %v1472
        %vm1483 = vcmp.eq.f32.partialorder %v1482, 8.507059e+37
        %v1484 = vand.u32 %v1472, 2147483648
        %v1485 = vor.u32 1.1754944e-38, %v1484
        %v1486 = vsel %vm1483, %v1485, %v1481
        %v1487 = vmul.f32 1.0, %v1486
        %1488 = vrot.lane.b32.xlu0 %v1444, 32
        %v1489 = vpop.permute.xlu0 %1488
        %v1491 = vmul.f32 %v1467, %v1489
        %1493 = vrot.lane.b32.xlu0 %v1491, 64
        %v1494 = vpop.permute.xlu0 %1493
        %v1496 = vadd.f32 %v562, %v1494
        %v1497 = vtanh.pop %v1496
        %v1498 = vsub.f32 1.0, %v1487
        %1500 = vrot.lane.b32.xlu0 %v1497, 96
        %v1501 = vpop.permute.xlu0 %1500
        %v1503 = vmul.f32 %v1498, %v1501
        %v1504 = vrot.slane %v1349, 1
        %v1506 = vmul.f32 %v1487, %v1504
        %v1507 = vadd.f32 %v1503, %v1506
        %v1509 = vrot.slane %v1418, 5
        %1510 = vrot.lane.b32.xlu0 %v1509, 96
        %v1511 = vpop.permute.xlu0 %1510
        %v1512 = vsel %vm520, %v1511, 0
        %1514 = vmatpush.msra.mxu0 0.0
        %1515 = vmatpush.msra.mxu0 0.0
        %1516 = vmatpush.msra.mxu0 0.0
        %1517 = vmatpush.msra.mxu0 0.0
        %1518 = vmatpush.msra.mxu0 0.0
        %1519 = vmatpush.msra.mxu0 0.0
        %1520 = vmatpush.msra.mxu0 0.0
        %1521 = vmatpush.msra.mxu0 0.0
        %1522 = vmatpush.msra.mxu0 0.0
        %1523 = vmatpush.msra.mxu0 0.0
        %1524 = vmatpush.msra.mxu0 0.0
        %1525 = vmatpush.msra.mxu0 0.0
        %1526 = vmatpush.msra.mxu0 %v567
        %1527 = vmatpush.msra.mxu0 %v566
        %1528 = vmatpush.msra.mxu0 %v565
        %1529 = vmatpush.msra.mxu0 %v564
        %1530 = vmatmul.f32.gmra.mxu0 %v1512
        %v1531 = vpop.f32.mrf.mxu0
        %v1532 = vadd.f32 %v572, %v1531
        %1533 = vdwg.mxu0
        %v1535 = vrot.slane %v1532, 2
        %v1537 = vadd.f32 %v542, %v1535
        %v1538 = vxor.u32 %v1537, 2147483648
        %v1539 = vmul.f32 %v1538, 1.442695
        %v1540 = vpow.pop %v1539
        %v1541 = vadd.f32 %v1540, 1.0
        %v1542 = vrcp.pop %v1541
        %v1543 = vmul.f32 %v1541, %v1542
        %v1544 = vsub.f32 1.0, %v1543
        %v1545 = vmul.f32 %v1542, %v1544
        %v1546 = vadd.f32 %v1542, %v1545
        %vm1547 = vweird.f32 %v1541
        %vm1548 = vweird.f32 %v1542
        %vm1549 = vmor %vm1547, %vm1548
        %v1550 = vsel %vm1549, %v1542, %v1546
        %v1551 = vand.u32 2147483647, %v1541
        %vm1552 = vcmp.eq.f32.partialorder %v1551, 8.507059e+37
        %v1553 = vand.u32 %v1541, 2147483648
        %v1554 = vor.u32 1.1754944e-38, %v1553
        %v1555 = vsel %vm1552, %v1554, %v1550
        %v1556 = vmul.f32 1.0, %v1555
        %1557 = vrot.lane.b32.xlu0 %v1535, 64
        %v1558 = vpop.permute.xlu0 %1557
        %v1560 = vmul.f32 %v1556, %v1558
        %1562 = vrot.lane.b32.xlu0 %v1560, 64
        %v1563 = vpop.permute.xlu0 %1562
        %v1565 = vadd.f32 %v542, %v1563
        %v1566 = vtanh.pop %v1565
        %v1567 = vsub.f32 1.0, %v1556
        %1569 = vrot.lane.b32.xlu0 %v1566, 96
        %v1570 = vpop.permute.xlu0 %1569
        %v1572 = vmul.f32 %v1567, %v1570
        %v1573 = vrot.slane %v1418, 7
        %v1575 = vmul.f32 %v1556, %v1573
        %v1576 = vadd.f32 %v1572, %v1575
        %v1578 = vrot.slane %v1507, 2
        %v1579 = vsel %vm520, %v1578, 0
        %1581 = vmatpush.msra.mxu0 0.0
        %1582 = vmatpush.msra.mxu0 0.0
        %1583 = vmatpush.msra.mxu0 0.0
        %1584 = vmatpush.msra.mxu0 0.0
        %1585 = vmatpush.msra.mxu0 0.0
        %1586 = vmatpush.msra.mxu0 0.0
        %1587 = vmatpush.msra.mxu0 0.0
        %1588 = vmatpush.msra.mxu0 0.0
        %1589 = vmatpush.msra.mxu0 0.0
        %1590 = vmatpush.msra.mxu0 0.0
        %1591 = vmatpush.msra.mxu0 0.0
        %1592 = vmatpush.msra.mxu0 0.0
        %1593 = vmatpush.msra.mxu0 %v571
        %1594 = vmatpush.msra.mxu0 %v570
        %1595 = vmatpush.msra.mxu0 %v569
        %1596 = vmatpush.msra.mxu0 %v568
        %1597 = vmatmul.f32.gmra.mxu0 %v1579
        %v1598 = vpop.f32.mrf.mxu0
        %v1599 = vadd.f32 %v573, %v1598
        %1600 = vdwg.mxu0
        %v1602 = vrot.slane %v1599, 7
        %1603 = vrot.lane.b32.xlu0 %v1602, 96
        %v1604 = vpop.permute.xlu0 %1603
        %v1606 = vadd.f32 %v542, %v1604
        %v1607 = vxor.u32 %v1606, 2147483648
        %v1608 = vmul.f32 %v1607, 1.442695
        %v1609 = vpow.pop %v1608
        %v1610 = vadd.f32 %v1609, 1.0
        %v1611 = vrcp.pop %v1610
        %v1612 = vmul.f32 %v1610, %v1611
        %v1613 = vsub.f32 1.0, %v1612
        %v1614 = vmul.f32 %v1611, %v1613
        %v1615 = vadd.f32 %v1611, %v1614
        %vm1616 = vweird.f32 %v1610
        %vm1617 = vweird.f32 %v1611
        %vm1618 = vmor %vm1616, %vm1617
        %v1619 = vsel %vm1618, %v1611, %v1615
        %v1620 = vand.u32 2147483647, %v1610
        %vm1621 = vcmp.eq.f32.partialorder %v1620, 8.507059e+37
        %v1622 = vand.u32 %v1610, 2147483648
        %v1623 = vor.u32 1.1754944e-38, %v1622
        %v1624 = vsel %vm1621, %v1623, %v1619
        %v1625 = vmul.f32 1.0, %v1624
        %v1626 = vadd.f32 %v562, %v1604
        %v1627 = vxor.u32 %v1626, 2147483648
        %v1628 = vmul.f32 %v1627, 1.442695
        %v1629 = vpow.pop %v1628
        %v1630 = vadd.f32 %v1629, 1.0
        %v1631 = vrcp.pop %v1630
        %v1632 = vmul.f32 %v1630, %v1631
        %v1633 = vsub.f32 1.0, %v1632
        %v1634 = vmul.f32 %v1631, %v1633
        %v1635 = vadd.f32 %v1631, %v1634
        %vm1636 = vweird.f32 %v1630
        %vm1637 = vweird.f32 %v1631
        %vm1638 = vmor %vm1636, %vm1637
        %v1639 = vsel %vm1638, %v1631, %v1635
        %v1640 = vand.u32 2147483647, %v1630
        %vm1641 = vcmp.eq.f32.partialorder %v1640, 8.507059e+37
        %v1642 = vand.u32 %v1630, 2147483648
        %v1643 = vor.u32 1.1754944e-38, %v1642
        %v1644 = vsel %vm1641, %v1643, %v1639
        %v1645 = vmul.f32 1.0, %v1644
        %1646 = vrot.lane.b32.xlu0 %v1602, 32
        %v1647 = vpop.permute.xlu0 %1646
        %v1649 = vmul.f32 %v1625, %v1647
        %1651 = vrot.lane.b32.xlu0 %v1649, 64
        %v1652 = vpop.permute.xlu0 %1651
        %v1654 = vadd.f32 %v562, %v1652
        %v1655 = vtanh.pop %v1654
        %v1656 = vsub.f32 1.0, %v1645
        %1658 = vrot.lane.b32.xlu0 %v1655, 96
        %v1659 = vpop.permute.xlu0 %1658
        %v1661 = vmul.f32 %v1656, %v1659
        %v1662 = vrot.slane %v1507, 1
        %v1664 = vmul.f32 %v1645, %v1662
        %v1665 = vadd.f32 %v1661, %v1664
        %v1667 = vrot.slane %v1576, 6
        %1668 = vrot.lane.b32.xlu0 %v1667, 96
        %v1669 = vpop.permute.xlu0 %1668
        %v1670 = vsel %vm520, %v1669, 0
        %1672 = vmatpush.msra.mxu0 0.0
        %1673 = vmatpush.msra.mxu0 0.0
        %1674 = vmatpush.msra.mxu0 0.0
        %1675 = vmatpush.msra.mxu0 0.0
        %1676 = vmatpush.msra.mxu0 0.0
        %1677 = vmatpush.msra.mxu0 0.0
        %1678 = vmatpush.msra.mxu0 0.0
        %1679 = vmatpush.msra.mxu0 0.0
        %1680 = vmatpush.msra.mxu0 0.0
        %1681 = vmatpush.msra.mxu0 0.0
        %1682 = vmatpush.msra.mxu0 0.0
        %1683 = vmatpush.msra.mxu0 0.0
        %1684 = vmatpush.msra.mxu0 %v567
        %1685 = vmatpush.msra.mxu0 %v566
        %1686 = vmatpush.msra.mxu0 %v565
        %1687 = vmatpush.msra.mxu0 %v564
        %1688 = vmatmul.f32.gmra.mxu0 %v1670
        %v1689 = vpop.f32.mrf.mxu0
        %v1690 = vadd.f32 %v572, %v1689
        %1691 = vdwg.mxu0
        %v1693 = vrot.slane %v1690, 1
        %v1695 = vadd.f32 %v542, %v1693
        %v1696 = vxor.u32 %v1695, 2147483648
        %v1697 = vmul.f32 %v1696, 1.442695
        %v1698 = vpow.pop %v1697
        %v1699 = vadd.f32 %v1698, 1.0
        %v1700 = vrcp.pop %v1699
        %v1701 = vmul.f32 %v1699, %v1700
        %v1702 = vsub.f32 1.0, %v1701
        %v1703 = vmul.f32 %v1700, %v1702
        %v1704 = vadd.f32 %v1700, %v1703
        %vm1705 = vweird.f32 %v1699
        %vm1706 = vweird.f32 %v1700
        %vm1707 = vmor %vm1705, %vm1706
        %v1708 = vsel %vm1707, %v1700, %v1704
        %v1709 = vand.u32 2147483647, %v1699
        %vm1710 = vcmp.eq.f32.partialorder %v1709, 8.507059e+37
        %v1711 = vand.u32 %v1699, 2147483648
        %v1712 = vor.u32 1.1754944e-38, %v1711
        %v1713 = vsel %vm1710, %v1712, %v1708
        %v1714 = vmul.f32 1.0, %v1713
        %1715 = vrot.lane.b32.xlu0 %v1693, 64
        %v1716 = vpop.permute.xlu0 %1715
        %v1718 = vmul.f32 %v1714, %v1716
        %1720 = vrot.lane.b32.xlu0 %v1718, 64
        %v1721 = vpop.permute.xlu0 %1720
        %v1723 = vadd.f32 %v542, %v1721
        %v1724 = vtanh.pop %v1723
        %v1725 = vsub.f32 1.0, %v1714
        %1727 = vrot.lane.b32.xlu0 %v1724, 96
        %v1728 = vpop.permute.xlu0 %1727
        %v1730 = vmul.f32 %v1725, %v1728
        %v1731 = vrot.slane %v1576, 7
        %v1733 = vmul.f32 %v1714, %v1731
        %v1734 = vadd.f32 %v1730, %v1733
        %v1736 = vrot.slane %v1665, 1
        %v1737 = vsel %vm520, %v1736, 0
        %1739 = vmatpush.msra.mxu0 0.0
        %1740 = vmatpush.msra.mxu0 0.0
        %1741 = vmatpush.msra.mxu0 0.0
        %1742 = vmatpush.msra.mxu0 0.0
        %1743 = vmatpush.msra.mxu0 0.0
        %1744 = vmatpush.msra.mxu0 0.0
        %1745 = vmatpush.msra.mxu0 0.0
        %1746 = vmatpush.msra.mxu0 0.0
        %1747 = vmatpush.msra.mxu0 0.0
        %1748 = vmatpush.msra.mxu0 0.0
        %1749 = vmatpush.msra.mxu0 0.0
        %1750 = vmatpush.msra.mxu0 0.0
        %1751 = vmatpush.msra.mxu0 %v571
        %1752 = vmatpush.msra.mxu0 %v570
        %1753 = vmatpush.msra.mxu0 %v569
        %1754 = vmatpush.msra.mxu0 %v568
        %1755 = vmatmul.f32.gmra.mxu0 %v1737
        %v1756 = vpop.f32.mrf.mxu0
        %v1757 = vadd.f32 %v573, %v1756
        %1758 = vdwg.mxu0
        %1760 = vrot.lane.b32.xlu0 %v1757, 96
        %v1761 = vpop.permute.xlu0 %1760
        %v1763 = vadd.f32 %v542, %v1761
        %v1764 = vxor.u32 %v1763, 2147483648
        %v1765 = vmul.f32 %v1764, 1.442695
        %v1766 = vpow.pop %v1765
        %v1767 = vadd.f32 %v1766, 1.0
        %v1768 = vrcp.pop %v1767
        %v1769 = vmul.f32 %v1767, %v1768
        %v1770 = vsub.f32 1.0, %v1769
        %v1771 = vmul.f32 %v1768, %v1770
        %v1772 = vadd.f32 %v1768, %v1771
        %vm1773 = vweird.f32 %v1767
        %vm1774 = vweird.f32 %v1768
        %vm1775 = vmor %vm1773, %vm1774
        %v1776 = vsel %vm1775, %v1768, %v1772
        %v1777 = vand.u32 2147483647, %v1767
        %vm1778 = vcmp.eq.f32.partialorder %v1777, 8.507059e+37
        %v1779 = vand.u32 %v1767, 2147483648
        %v1780 = vor.u32 1.1754944e-38, %v1779
        %v1781 = vsel %vm1778, %v1780, %v1776
        %v1782 = vmul.f32 1.0, %v1781
        %v1783 = vadd.f32 %v562, %v1761
        %v1784 = vxor.u32 %v1783, 2147483648
        %v1785 = vmul.f32 %v1784, 1.442695
        %v1786 = vpow.pop %v1785
        %v1787 = vadd.f32 %v1786, 1.0
        %v1788 = vrcp.pop %v1787
        %v1789 = vmul.f32 %v1787, %v1788
        %v1790 = vsub.f32 1.0, %v1789
        %v1791 = vmul.f32 %v1788, %v1790
        %v1792 = vadd.f32 %v1788, %v1791
        %vm1793 = vweird.f32 %v1787
        %vm1794 = vweird.f32 %v1788
        %vm1795 = vmor %vm1793, %vm1794
        %v1796 = vsel %vm1795, %v1788, %v1792
        %v1797 = vand.u32 2147483647, %v1787
        %vm1798 = vcmp.eq.f32.partialorder %v1797, 8.507059e+37
        %v1799 = vand.u32 %v1787, 2147483648
        %v1800 = vor.u32 1.1754944e-38, %v1799
        %v1801 = vsel %vm1798, %v1800, %v1796
        %v1802 = vmul.f32 1.0, %v1801
        %1803 = vrot.lane.b32.xlu0 %v1757, 32
        %v1804 = vpop.permute.xlu0 %1803
        %v1806 = vmul.f32 %v1782, %v1804
        %1808 = vrot.lane.b32.xlu0 %v1806, 64
        %v1809 = vpop.permute.xlu0 %1808
        %v1811 = vadd.f32 %v562, %v1809
        %v1812 = vtanh.pop %v1811
        %v1813 = vsub.f32 1.0, %v1802
        %1815 = vrot.lane.b32.xlu0 %v1812, 96
        %v1816 = vpop.permute.xlu0 %1815
        %v1818 = vmul.f32 %v1813, %v1816
        %v1820 = vmul.f32 %v1802, %v1736
        %v1821 = vadd.f32 %v1818, %v1820
        %vm1822 = vcmask 1040384
        %v1823 = vsel %vm1822, %v635, %v786
        %v1824 = vsel %vm482, %v1823, %v944
        %vm1825 = vcmask 1042432
        %v1826 = vsel %vm1825, %v1824, %v1102
        %vm1827 = vcmask 1043456
        %v1828 = vsel %vm1827, %v1826, %v1260
        %vm1829 = vcmask 1044480
        %v1830 = vsel %vm1829, %v1828, %v1418
        %vm1831 = vcmask 1045504
        %v1832 = vsel %vm1831, %v1830, %v1576
        %vm1833 = vcmask 1046528
        %v1834 = vsel %vm1833, %v1832, %v1734
        %v1835 = vsel %vm1822, %v1821, %v1665
        %v1836 = vsel %vm482, %v1835, %v1507
        %v1837 = vsel %vm1825, %v1836, %v1349
        %v1838 = vsel %vm1827, %v1837, %v1191
        %v1839 = vsel %vm1829, %v1838, %v1033
        %v1840 = vsel %vm1831, %v1839, %v875
        %v1841 = vsel %vm1833, %v1840, %v718
        %1843 = vrot.lane.b32.xlu0 %v1834, 96
        %v1844 = vpop.permute.xlu0 %1843
        %1847 = vrot.lane.b32.xlu0 %v1841, 32
        %v1848 = vpop.permute.xlu0 %1847
        %v1850 = vsel %vm520, %v1844, %v1848
        %v1851 = vld [vmem:[%s8] sm:$0xff]
        %v1852 = vld [vmem:[%s8 + $0x8] sm:$0xff]
        %v1853 = vld [vmem:[%s8 + $0x10] sm:$0xff]
        %v1854 = vld [vmem:[%s8 + $0x18] sm:$0xff]
        %v1855 = vld [vmem:[%s8 + $0x20] sm:$0xff]
        %v1856 = vld [vmem:[%s8 + $0x28] sm:$0xff]
        %v1857 = vld [vmem:[%s8 + $0x30] sm:$0xff]
        %v1858 = vld [vmem:[%s8 + $0x38] sm:$0xff]
        %v1859 = vld [vmem:[%s9] sm:$0x1]
        %v1861 = vperm.slane %v1859, 0
        %vm1863 = vcmask 523264
        %v1865 = vsel %vm1863, %v1850, 0
        %1867 = vmatpush.msra.mxu0 0.0
        %1868 = vmatpush.msra.mxu0 0.0
        %1869 = vmatpush.msra.mxu0 0.0
        %1870 = vmatpush.msra.mxu0 0.0
        %1871 = vmatpush.msra.mxu0 0.0
        %1872 = vmatpush.msra.mxu0 0.0
        %1873 = vmatpush.msra.mxu0 0.0
        %1874 = vmatpush.msra.mxu0 0.0
        %1875 = vmatpush.msra.mxu0 %v1858
        %1876 = vmatpush.msra.mxu0 %v1857
        %1877 = vmatpush.msra.mxu0 %v1856
        %1878 = vmatpush.msra.mxu0 %v1855
        %1879 = vmatpush.msra.mxu0 %v1854
        %1880 = vmatpush.msra.mxu0 %v1853
        %1881 = vmatpush.msra.mxu0 %v1852
        %1882 = vmatpush.msra.mxu0 %v1851
        %1883 = vmatmul.f32.gmra.mxu0 %v1865
        %v1884 = vpop.f32.mrf.mxu0
        %v1885 = vadd.f32 %v1861, %v1884
        %1886 = vdwg.mxu0
        %vm1887 = vcmask 64512
        %v1888 = vsel %vm1887, %v1885, -inf
        %v1889 = vrot.slane %v1888, 4
        %v1890 = vmax.f32 %v1888, %v1889
        %v1891 = vrot.slane %v1890, 2
        %v1892 = vmax.f32 %v1890, %v1891
        %v1893 = vrot.slane %v1892, 1
        %v1894 = vmax.f32 %v1892, %v1893
        %v1895 = vsub.f32 %v1885, %v1894
        %v1896 = vmul.f32 %v1895, 1.442695
        %v1897 = vpow.pop %v1896
        %v1898 = vsel %vm1887, %v1897, 0.0
        %v1899 = vrot.slane %v1898, 4
        %v1900 = vadd.f32 %v1898, %v1899
        %v1901 = vrot.slane %v1900, 2
        %v1902 = vadd.f32 %v1900, %v1901
        %v1903 = vrot.slane %v1902, 1
        %v1904 = vadd.f32 %v1902, %v1903
        %v1905 = vrcp.pop %v1904
        %v1906 = vmul.f32 %v1904, %v1905
        %v1907 = vsub.f32 1.0, %v1906
        %v1908 = vmul.f32 %v1905, %v1907
        %v1909 = vadd.f32 %v1905, %v1908
        %vm1910 = vweird.f32 %v1904
        %vm1911 = vweird.f32 %v1905
        %vm1912 = vmor %vm1910, %vm1911
        %v1913 = vsel %vm1912, %v1905, %v1909
        %v1914 = vand.u32 2147483647, %v1904
        %vm1915 = vcmp.eq.f32.partialorder %v1914, 8.507059e+37
        %v1916 = vand.u32 %v1904, 2147483648
        %v1917 = vor.u32 1.1754944e-38, %v1916
        %v1918 = vsel %vm1915, %v1917, %v1913
        %v1919 = vmul.f32 %v1897, %v1918
        %v1920 = vsel %vm1887, %v1919, 0.0
        %v1921 = vrot.slane %v1920, 4
        %v1922 = vadd.f32 %v1920, %v1921
        %v1923 = vrot.slane %v1922, 2
        %v1924 = vadd.f32 %v1922, %v1923
        %v1925 = vrot.slane %v1924, 1
        %v1926 = vadd.f32 %v1924, %v1925
        %v1928 = vsel %vm1887, %v1926, 0
        %1930 = vmatpush.msra.mxu0 0.0
        %1931 = vmatpush.msra.mxu0 0.0
        %1932 = vmatpush.msra.mxu0 0.0
        %1933 = vmatpush.msra.mxu0 0.0
        %1934 = vmatpush.msra.mxu0 0.0
        %1935 = vmatpush.msra.mxu0 0.0
        %1936 = vmatpush.msra.mxu0 0.0
        %1937 = vmatpush.msra.mxu0 0.0
        %1938 = vmatpush.msra.mxu0 0.0
        %1939 = vmatpush.msra.mxu0 0.0
        %1940 = vmatpush.msra.mxu0 0.0
        %1941 = vmatpush.msra.mxu0 0.0
        %1942 = vmatpush.msra.mxu0 0.0
        %1943 = vmatpush.msra.mxu0 0.0
        %1944 = vmatpush.msra.mxu0 0.0
        %1945 = vmatpush.msra.mxu0 %v1850
        %1946 = vmatmul.f32.gmra.mxu0 %v1928
        %v1947 = vpop.f32.mrf.mxu0
        %v1948 = vadd.f32 0.0, %v1947
        %1949 = vdwg.mxu0
        %v1951 = vrot.slane %v1734, 7
        %1952 = vrot.lane.b32.xlu0 %v1951, 32
        %v1953 = vpop.permute.xlu0 %1952
        %1955 = vrot.lane.b32.xlu0 %v788, 96
        %v1956 = vpop.permute.xlu0 %1955
        %v1958 = vsel %vm1863, %v1948, %v1953
        %vm1959 = vcmask 785408
        %v1960 = vsel %vm1959, %v1958, %v1956
        %v1961 = vld [vmem:[%s10] sm:$0xff]
        %v1962 = vld [vmem:[%s10 + $0x8] sm:$0xff]
        %v1963 = vld [vmem:[%s10 + $0x10] sm:$0xff]
        %v1964 = vld [vmem:[%s10 + $0x18] sm:$0xff]
        %v1965 = vld [vmem:[%s10 + $0x20] sm:$0xff]
        %v1966 = vld [vmem:[%s10 + $0x28] sm:$0xff]
        %v1967 = vld [vmem:[%s10 + $0x30] sm:$0xff]
        %v1968 = vld [vmem:[%s10 + $0x38] sm:$0xff]
        %v1969 = vld [vmem:[%s10 + $0x40] sm:$0xff]
        %v1970 = vld [vmem:[%s10 + $0x48] sm:$0xff]
        %v1971 = vld [vmem:[%s10 + $0x50] sm:$0xff]
        %v1972 = vld [vmem:[%s10 + $0x58] sm:$0xff]
        %v1973 = vld [vmem:[%s10 + $0x60] sm:$0xff]
        %v1974 = vld [vmem:[%s10 + $0x68] sm:$0xff]
        %v1975 = vld [vmem:[%s10 + $0x70] sm:$0xff]
        %v1976 = vld [vmem:[%s10 + $0x78] sm:$0xff]
        %v1977 = vld [vmem:[%s11] sm:$0x1]
        %1978 = vmatpush.msra.mxu0 %v1976
        %1979 = vmatpush.msra.mxu0 %v1975
        %1980 = vmatpush.msra.mxu0 %v1974
        %1981 = vmatpush.msra.mxu0 %v1973
        %1982 = vmatpush.msra.mxu0 %v1972
        %1983 = vmatpush.msra.mxu0 %v1971
        %1984 = vmatpush.msra.mxu0 %v1970
        %1985 = vmatpush.msra.mxu0 %v1969
        %1986 = vmatpush.msra.mxu0 %v1968
        %1987 = vmatpush.msra.mxu0 %v1967
        %1988 = vmatpush.msra.mxu0 %v1966
        %1989 = vmatpush.msra.mxu0 %v1965
        %1990 = vmatpush.msra.mxu0 %v1964
        %1991 = vmatpush.msra.mxu0 %v1963
        %1992 = vmatpush.msra.mxu0 %v1962
        %1993 = vmatpush.msra.mxu0 %v1961
        %1994 = vmatmul.f32.gmra.mxu0 %v1960
        %v1995 = vpop.f32.mrf.mxu0
        %v1996 = vadd.f32 %v1977, %v1995
        %1997 = vdwg.mxu0
        %v1998 = vmax.f32 %v1996, 0.0
        %v1999 = vld [vmem:[%s12] sm:$0xff]
        %v2000 = vld [vmem:[%s12 + $0x8] sm:$0xff]
        %v2001 = vld [vmem:[%s12 + $0x10] sm:$0xff]
        %v2002 = vld [vmem:[%s12 + $0x18] sm:$0xff]
        %v2003 = vld [vmem:[%s13] sm:$0x1]
        %v2005 = vsel %vm520, %v1998, 0
        %2007 = vmatpush.msra.mxu0 0.0
        %2008 = vmatpush.msra.mxu0 0.0
        %2009 = vmatpush.msra.mxu0 0.0
        %2010 = vmatpush.msra.mxu0 0.0
        %2011 = vmatpush.msra.mxu0 0.0
        %2012 = vmatpush.msra.mxu0 0.0
        %2013 = vmatpush.msra.mxu0 0.0
        %2014 = vmatpush.msra.mxu0 0.0
        %2015 = vmatpush.msra.mxu0 0.0
        %2016 = vmatpush.msra.mxu0 0.0
        %2017 = vmatpush.msra.mxu0 0.0
        %2018 = vmatpush.msra.mxu0 0.0
        %2019 = vmatpush.msra.mxu0 %v2002
        %2020 = vmatpush.msra.mxu0 %v2001
        %2021 = vmatpush.msra.mxu0 %v2000
        %2022 = vmatpush.msra.mxu0 %v1999
        %2023 = vmatmul.f32.gmra.mxu0 %v2005
        %v2024 = vpop.f32.mrf.mxu0
        %v2025 = vadd.f32 %v2003, %v2024
        %2026 = vdwg.mxu0
        %v2027 = vxor.u32 %v2025, 2147483648
        %v2028 = vmul.f32 %v2027, 1.442695
        %v2029 = vpow.pop %v2028
        %v2030 = vadd.f32 %v2029, 1.0
        %v2031 = vrcp.pop %v2030
        %v2032 = vmul.f32 %v2030, %v2031
        %v2033 = vsub.f32 1.0, %v2032
        %v2034 = vmul.f32 %v2031, %v2033
        %v2035 = vadd.f32 %v2031, %v2034
        %vm2036 = vweird.f32 %v2030
        %vm2037 = vweird.f32 %v2031
        %vm2038 = vmor %vm2036, %vm2037
        %v2039 = vsel %vm2038, %v2031, %v2035
        %v2040 = vand.u32 2147483647, %v2030
        %vm2041 = vcmp.eq.f32.partialorder %v2040, 8.507059e+37
        %v2042 = vand.u32 %v2030, 2147483648
        %v2043 = vor.u32 1.1754944e-38, %v2042
        %v2044 = vsel %vm2041, %v2043, %v2039
        %v2045 = vmul.f32 1.0, %v2044
        %vm2046 = vcmask 24576
        %2047 = vst.msk [vmem:[%s457] sm:$0x1] %vm2046, %v2045
        %s2048 = sand.u32 %s335, 1
        %s2049 = scalar_lea.sflag [#allocation3], %s2048
        %s2050 = sand.u32 %s335, 1
        %s2051 = scalar_lea.vmem [#allocation2], %s2050
        // Predicated region
        $region77: #{tpu_custom_call.1} parent=75 // pred_check
          %p2052 = pneg %p345
        $region78: #{tpu_custom_call.1} parent=75 // pred_check_branch
          %2054 = sbr.rel (%p2052) target = $region80
        $region79: #{tpu_custom_call.1} parent=75 // pred_region
          %2056 = vsyncadd %s2049, 0
          %s2057 = scalar_lea.hbm %s14, %s28
          %s2059 = sshll.u32 %s2051, 4
          %s2060 = int_to_ptr.vmem [resolvable:$true] %s2059
          %s2061 = sshll.u32 %s2057, 4
          %s2062 = int_to_ptr.hbm [resolvable:$true] %s2061
          %2064 = dma.vmem_to_hbm [thread:$0]  %s2060, 16, %s2062, %s2049
        $region80: #{tpu_custom_call.1} parent=75 // pred_fallthru
          _
      $region76: #{tpu_custom_call.1} parent=5 // pred_fallthru
        _
      %p2065 = scmp.le.s32.totalorder 2, %s23
      // Predicated region
      $region81: #{tpu_custom_call.1} parent=5 // pred_check
        %p2066 = pneg %p2065
      $region82: #{tpu_custom_call.1} parent=5 // pred_check_branch
        %2068 = sbr.rel (%p2066) target = $region84
      $region83: #{tpu_custom_call.1} parent=5 // pred_region
        %s2069 = ssub.s32 %s23, 2
        // Predicated region
        $region85: #{tpu_custom_call.1} parent=83 // pred_check
          %p2070 = pneg %p351
        $region86: #{tpu_custom_call.1} parent=83 // pred_check_branch
          %2072 = sbr.rel (%p2070) target = $region88
        $region87: #{tpu_custom_call.1} parent=83 // pred_region
          %s2073 = sand.u32 %s336, 1
          %s2074 = scalar_lea.sflag [#allocation3], %s2073
          %s2075 = sand.u32 %s336, 1
          %s2076 = scalar_lea.vmem [#allocation2], %s2075
          %2078 = dma.done %s2074, 16
        $region88: #{tpu_custom_call.1} parent=83 // pred_fallthru
          _
      $region84: #{tpu_custom_call.1} parent=5 // pred_fallthru
        _
    $region6: #{tpu_custom_call.1} parent=1 // loop_footer
      %s27 = sadd.s32 1, %s23
    $region7: #{tpu_custom_call.1} parent=1 // loop_footer_branch
      %22 = sbr.rel target = $region3
    $region8: #{tpu_custom_call.1} parent=1 // loop_exit
      _
    %2079 = vsyncpa [#allocation3], 1
    %s2080 = scalar_lea.sflag [#allocation3], 1
    %2081 = vsyncpa %s2080, 1

</llo_original>
